<compile_context>
chip_gen: v7x
topology: tpu7x:2x2x1
jax: 0.10.0
libtpu: 0.0.40
codegen_flags: <defaults>
</compile_context>

<pallas_src>
import functools

import jax
import jax.numpy as jnp
from jax.experimental import pallas as pl
from jax.experimental.pallas import tpu as pltpu


def _round_up(x, m):
    return ((x + m - 1) // m) * m


def conv_module_kernel(xl_ref, xa_ref, xr_ref,
                       w1a_ref, b1a_ref, w1b_ref, b1b_ref,
                       wd_ref, bd_ref, gamma_ref, beta_ref,
                       w2_ref, b2_ref,
                       o_ref,
                       xbuf_ref, hbuf_ref, ybuf_ref,
                       *, C, Cp, K, T, tT, hh, pad, SB, eps):
    j = pl.program_id(1)
    bf16 = jnp.bfloat16

    # ---- assemble the bf16 conv1 LHS: [left halo | current tile | right halo]
    xbuf_ref[0:hh, :] = xl_ref[...].astype(bf16)
    xbuf_ref[hh:hh + tT, :] = xa_ref[...].astype(bf16)
    xbuf_ref[hh + tT:hh + tT + hh, :] = xr_ref[...].astype(bf16)

    # ---- pointwise_conv1 (k=1 conv == matmul; one fused call per GLU half) --
    x_all = xbuf_ref[...]                              # (tT + 2*hh, C) bf16
    a = jnp.dot(x_all, w1a_ref[...],
                preferred_element_type=jnp.float32) + b1a_ref[...]
    g = jnp.dot(x_all, w1b_ref[...],
                preferred_element_type=jnp.float32) + b1b_ref[...]
    # sigmoid(g) = 1 / (1 + exp(-g)): exp and the approx reciprocal both run on
    # the EUP slot, keeping the VALU free.
    hbuf_ref[...] = a * pl.reciprocal(1.0 + jnp.exp(-g), approx=True)

    # ---- zero h rows that are the depthwise conv's zero padding / beyond T --
    # Only the first / last time tiles ever enter these branches.  The zeroing
    # uses a select, so stale data in partially-fetched blocks (even NaN/Inf)
    # can never leak into valid output rows.
    @pl.when(j == 0)
    def _():
        hbuf_ref[0:hh, :] = jnp.zeros((hh, Cp), jnp.float32)

    @pl.when((j + 1) * tT + hh > T)
    def _():
        row = jax.lax.broadcasted_iota(jnp.int32, (tT + 2 * hh, 1), 0)
        t = j * tT - hh + row                       # global time of each h row
        hbuf_ref[...] = jnp.where(t < T, hbuf_ref[...], 0.0)

    # ---- depthwise conv (groups=C) + LayerNorm + ReLU, chunked over rows ----
    wd = wd_ref[...]                                 # (K, Cp) tap weights
    bd = bd_ref[...]                                 # (1, Cp)
    gamma = gamma_ref[...]                           # (1, Cp)
    beta = beta_ref[...]                             # (1, Cp)
    if Cp != C:                                      # mask for padded LN lanes
        cmask = (jax.lax.broadcasted_iota(jnp.int32, (1, Cp), 1) < C
                 ).astype(jnp.float32)
    off = hh - pad                                   # first tap's row offset
    n_grp = Cp // 128

    base = 0
    while base < tT:                                 # static (trace-time) loop
        ch = min(SB, tT - base)                      # chunk rows (multiple of 8)
        parts = []
        for gi in range(n_grp):                      # 128-lane groups
            lo = gi * 128
            # One aligned VMEM read of the chunk slab (+ tail) per lane group;
            # the K shifted slices below act on this in-register value instead
            # of re-reading hbuf at misaligned offsets K times.
            slab = hbuf_ref[base:base + ch + 2 * hh, lo:lo + 128]
            accg = slab[off:off + ch, :] * wd[0:1, lo:lo + 128]
            for k in range(1, K):
                accg = accg + slab[off + k:off + k + ch, :] * wd[k:k + 1, lo:lo + 128]
            parts.append(accg)
        acc = parts[0] if n_grp == 1 else jnp.concatenate(parts, axis=1)
        acc = acc + bd                               # depthwise bias added once

        # LayerNorm over the real C channels (+ ReLU).  Padded channels of all
        # parameters are exactly zero, so acc's padded lanes are zero here.
        mean = jnp.sum(acc, axis=-1, keepdims=True) * (1.0 / C)
        cen = acc - mean
        if Cp != C:                                  # skip when C is lane-dense
            cen = cen * cmask
        var = jnp.sum(cen * cen, axis=-1, keepdims=True) * (1.0 / C)
        y = cen * jax.lax.rsqrt(var + eps) * gamma + beta
        ybuf_ref[base:base + ch, :] = jnp.maximum(y, 0.0).astype(bf16)
        base += ch

    # ---- pointwise_conv2 (k=1 conv == matmul) -------------------------------
    out = jnp.dot(ybuf_ref[...], w2_ref[...],
                  preferred_element_type=jnp.float32) + b2_ref[...]
    o_ref[...] = out.astype(o_ref.dtype)


def conformer_conv_module(x, params, *, kernel_size=15, eps=1e-5, time_tile=512):
    """x: (B, T, C).  Returns (out (B, T, C), new_cache (0,0,0))."""
    # TODO(synk): mask_pad masking / causal-cache (lorder>0) paths are not
    # implemented; the module defaults (fake mask, lorder=0) are reproduced.
    B, T, C = x.shape
    K = kernel_size
    assert (K - 1) % 2 == 0
    pad = (K - 1) // 2
    w1, b1, wd, bd, gamma, beta, w2, b2 = params

    Cp = _round_up(C, 128)                      # lane-dense intermediate channels
    hh = _round_up(max(pad, 1), 8)              # halo rows (>= pad, sublane aligned)
    tT = max(hh, min(_round_up(time_tile, hh), _round_up(T, hh)))
    assert tT % hh == 0
    nT = -(-T // tT)                            # ceil-div; with B*nT >= 2 the two
    S = tT // hh                                # v7x TensorCores share the grid
    max_rb = (T - 1) // hh                      # last in-bounds hh-block index
    # Depthwise row-chunk size: keep per-chunk slab + accumulators register-friendly.
    SB = min(tT, 128, max(8, ((160 * 1024) // (4 * Cp + 512)) // 8 * 8))

    # Reshape PyTorch conv weights into lane-friendly matmul / tap layouts.
    # Invariant: every padded channel of every parameter is exactly zero
    # (LayerNorm's mean/var over the true C and conv2's padded rows rely on it).
    cout = (0, Cp - C)
    w1m = w1[:, :, 0]                                                    # (2C, C)
    w1a_t = jnp.pad(jnp.transpose(w1m[:C]), ((0, 0), cout)).astype(jnp.bfloat16)   # (C, Cp)
    w1b_t = jnp.pad(jnp.transpose(w1m[C:]), ((0, 0), cout)).astype(jnp.bfloat16)   # (C, Cp)
    b1a = jnp.pad(b1[:C], cout).astype(jnp.float32).reshape(1, Cp)
    b1b = jnp.pad(b1[C:], cout).astype(jnp.float32).reshape(1, Cp)
    wdp = jnp.pad(jnp.transpose(wd[:, 0, :]), ((0, 0), cout)).astype(jnp.float32)  # (K, Cp)
    bdp = jnp.pad(bd, cout).astype(jnp.float32).reshape(1, Cp)
    gp = jnp.pad(gamma, cout).astype(jnp.float32).reshape(1, Cp)
    bp = jnp.pad(beta, cout).astype(jnp.float32).reshape(1, Cp)
    w2_t = jnp.pad(jnp.transpose(w2[:, :, 0]), (cout, (0, 0))).astype(jnp.bfloat16)  # (Cp, C)
    b2p = b2.astype(jnp.float32).reshape(1, C)

    def rep(shape):
        n = len(shape)
        return pl.BlockSpec(shape, lambda b, j, _n=n: (0,) * _n)

    kernel = functools.partial(
        conv_module_kernel,
        C=C, Cp=Cp, K=K, T=T, tT=tT, hh=hh, pad=pad, SB=SB, eps=eps)

    out = pl.pallas_call(
        kernel,
        out_shape=jax.ShapeDtypeStruct((B, T, C), x.dtype),
        grid_spec=pltpu.PrefetchScalarGridSpec(
            num_scalar_prefetch=0,
            grid=(B, nT),
            in_specs=[
                # left halo: tail of the previous tile, clamped at the start
                pl.BlockSpec((None, hh, C),
                             lambda b, j: (b, jnp.maximum(j * S - 1, 0), 0)),
                # current time tile
                pl.BlockSpec((None, tT, C), lambda b, j: (b, j, 0)),
                # right halo: head of the next tile, clamped at the end
                pl.BlockSpec((None, hh, C),
                             lambda b, j: (b, jnp.minimum((j + 1) * S, max_rb), 0)),
                # replicated weights / biases / norm params (could additionally
                # be single-buffered via pipeline_mode=pl.Buffered(1) if VMEM
                # headroom were ever needed)
                rep(w1a_t.shape), rep(b1a.shape),
                rep(w1b_t.shape), rep(b1b.shape),
                rep(wdp.shape), rep(bdp.shape),
                rep(gp.shape), rep(bp.shape),
                rep(w2_t.shape), rep(b2p.shape),
            ],
            out_specs=pl.BlockSpec((None, tT, C), lambda b, j: (b, j, 0)),
            scratch_shapes=[
                pltpu.VMEM((tT + 2 * hh, C), jnp.bfloat16),   # fused conv1 LHS
                pltpu.VMEM((tT + 2 * hh, Cp), jnp.float32),   # GLU output h (+halos)
                pltpu.VMEM((tT, Cp), jnp.bfloat16),           # LN/ReLU output (conv2 LHS)
            ],
        ),
        compiler_params=pltpu.CompilerParams(
            dimension_semantics=("parallel", "parallel"),
            vmem_limit_bytes=48 * 1024 * 1024),
    )(x, x, x,
      w1a_t, b1a, w1b_t, b1b, wdp, bdp, gp, bp, w2_t, b2p)

    new_cache = jnp.zeros((0, 0, 0), dtype=x.dtype)
    return out, new_cache


def ref_forward(x, params, *, kernel_size=15, eps=1e-5):
    """Plain-JAX f32 reference mirroring the PyTorch module (verification)."""
    w1, b1, wd, bd, gamma, beta, w2, b2 = params
    B, T, C = x.shape
    xc = jnp.transpose(x, (0, 2, 1))                              # (B, C, T)
    y = jnp.einsum('oc,bct->bot', w1[:, :, 0], xc) + b1[None, :, None]
    h = y[:, :C] * jax.nn.sigmoid(y[:, C:])                       # (B, C, T)
    pad = (kernel_size - 1) // 2
    hp = jnp.pad(h, ((0, 0), (0, 0), (pad, pad)))
    dw = jnp.zeros_like(h)
    for k in range(kernel_size):
        dw = dw + hp[:, :, k:k + T] * wd[:, 0, k][None, :, None]
    dw = dw + bd[None, :, None]
    v = jnp.transpose(dw, (0, 2, 1))                              # (B, T, C)
    mean = jnp.mean(v, -1, keepdims=True)
    var = jnp.mean((v - mean) ** 2, -1, keepdims=True)
    v = (v - mean) / jnp.sqrt(var + eps) * gamma + beta
    v = jnp.maximum(v, 0.0)
    return jnp.einsum('btc,oc->bto', v, w2[:, :, 0]) + b2


def init_params(key, channels, kernel_size=15):
    ks = jax.random.split(key, 6)
    C, K = channels, kernel_size
    w1 = 0.1 * jax.random.normal(ks[0], (2 * C, C, 1), jnp.float32)
    b1 = 0.1 * jax.random.normal(ks[1], (2 * C,), jnp.float32)
    wd = 0.1 * jax.random.normal(ks[2], (C, 1, K), jnp.float32)
    bd = 0.1 * jax.random.normal(ks[3], (C,), jnp.float32)
    gamma = jnp.ones((C,), jnp.float32)
    beta = jnp.zeros((C,), jnp.float32)
    w2 = 0.1 * jax.random.normal(ks[4], (C, C, 1), jnp.float32)
    b2 = 0.1 * jax.random.normal(ks[5], (C,), jnp.float32)
    return (w1, b1, wd, bd, gamma, beta, w2, b2)


def _run_case(key, B, T, C, K, time_tile, tol):
    kx, kp = jax.random.split(key)
    x = jax.random.normal(kx, (B, T, C), jnp.float32)
    params = init_params(kp, C, K)
    out, new_cache = conformer_conv_module(x, params, kernel_size=K,
                                           time_tile=time_tile)
    out = jax.block_until_ready(out)
    ref = ref_forward(x, params, kernel_size=K)
    assert out.shape == (B, T, C)
    assert new_cache.shape == (0, 0, 0)
    err = float(jnp.max(jnp.abs(out - ref)))
    # bf16 MXU matmuls + approx-reciprocal sigmoid vs a pure-f32 reference.
    assert err < tol, f"mismatch (B={B},T={T},C={C}): max abs err {err}"
    return err


if __name__ == "__main__":
    key = jax.random.PRNGKey(0)
    k1, k2 = jax.random.split(key)
    # Case 1: C < 128 -> exercises padded-lane LayerNorm masking and a single
    # partial time tile.
    _run_case(k1, B=2, T=16, C=32, K=15, time_tile=512, tol=5e-2)
    # Case 2: C == 128 (Cp == C path), several time tiles with left/right halos
    # and a partial last tile (larger tolerance: longer bf16 contractions).
    _run_case(k2, B=1, T=300, C=128, K=15, time_tile=128, tol=1e-1)
    print("KERNEL_OK")
</pallas_src>

<mosaic_0001>
module attributes {stable_mosaic.version = 11 : i64} {
  func.func @conv_module_kernel(%arg0: i32, %arg1: i32, %arg2: memref<1x8x32xf32, #tpu.memory_space<vmem>>, %arg3: memref<1x16x32xf32, #tpu.memory_space<vmem>>, %arg4: memref<1x8x32xf32, #tpu.memory_space<vmem>>, %arg5: memref<32x128xbf16, #tpu.memory_space<vmem>>, %arg6: memref<1x128xf32, #tpu.memory_space<vmem>>, %arg7: memref<32x128xbf16, #tpu.memory_space<vmem>>, %arg8: memref<1x128xf32, #tpu.memory_space<vmem>>, %arg9: memref<15x128xf32, #tpu.memory_space<vmem>>, %arg10: memref<1x128xf32, #tpu.memory_space<vmem>>, %arg11: memref<1x128xf32, #tpu.memory_space<vmem>>, %arg12: memref<1x128xf32, #tpu.memory_space<vmem>>, %arg13: memref<128x32xbf16, #tpu.memory_space<vmem>>, %arg14: memref<1x32xf32, #tpu.memory_space<vmem>>, %arg15: memref<1x16x32xf32, #tpu.memory_space<vmem>>, %arg16: memref<32x32xbf16, #tpu.memory_space<vmem>>, %arg17: memref<32x128xf32, #tpu.memory_space<vmem>>, %arg18: memref<16x128xbf16, #tpu.memory_space<vmem>>) attributes {dimension_semantics = [#tpu.dimension_semantics<parallel>, #tpu.dimension_semantics<parallel>], iteration_bounds = array<i64: 2, 1>, scalar_prefetch = 0 : i64, scratch_operands = 3 : i64, tpu.core_type = #tpu.core_type<tc>, window_params = [{transform_indices = @transform_0, window_bounds = array<i64: 1, 8, 32>}, {transform_indices = @transform_1, window_bounds = array<i64: 1, 16, 32>}, {transform_indices = @transform_2, window_bounds = array<i64: 1, 8, 32>}, {pipeline_mode = #tpu.pipeline_mode<synchronous>, transform_indices = @transform_3, window_bounds = array<i64: 32, 128>}, {pipeline_mode = #tpu.pipeline_mode<synchronous>, transform_indices = @transform_4, window_bounds = array<i64: 1, 128>}, {pipeline_mode = #tpu.pipeline_mode<synchronous>, transform_indices = @transform_5, window_bounds = array<i64: 32, 128>}, {pipeline_mode = #tpu.pipeline_mode<synchronous>, transform_indices = @transform_6, window_bounds = array<i64: 1, 128>}, {pipeline_mode = #tpu.pipeline_mode<synchronous>, transform_indices = @transform_7, window_bounds = array<i64: 15, 128>}, {pipeline_mode = #tpu.pipeline_mode<synchronous>, transform_indices = @transform_8, window_bounds = array<i64: 1, 128>}, {pipeline_mode = #tpu.pipeline_mode<synchronous>, transform_indices = @transform_9, window_bounds = array<i64: 1, 128>}, {pipeline_mode = #tpu.pipeline_mode<synchronous>, transform_indices = @transform_10, window_bounds = array<i64: 1, 128>}, {pipeline_mode = #tpu.pipeline_mode<synchronous>, transform_indices = @transform_11, window_bounds = array<i64: 128, 32>}, {pipeline_mode = #tpu.pipeline_mode<synchronous>, transform_indices = @transform_12, window_bounds = array<i64: 1, 32>}, {transform_indices = @transform_13, window_bounds = array<i64: 1, 16, 32>}]} {
    %c0 = arith.constant 0 : index
    %c0_0 = arith.constant 0 : index
    %c0_1 = arith.constant 0 : index
    %0 = vector.load %arg2[%c0, %c0_0, %c0_1] : memref<1x8x32xf32, #tpu.memory_space<vmem>>, vector<1x8x32xf32>
    %1 = vector.shape_cast %0 : vector<1x8x32xf32> to vector<8x32xf32>
    %2 = arith.truncf %1 : vector<8x32xf32> to vector<8x32xbf16>
    %c0_2 = arith.constant 0 : index
    %c0_3 = arith.constant 0 : index
    %3 = vector.load %arg16[%c0_2, %c0_3] : memref<32x32xbf16, #tpu.memory_space<vmem>>, vector<8x32xbf16>
    tpu.vector_store %arg16[%c0_2, %c0_3], %2 {strides = array<i32>} : memref<32x32xbf16, #tpu.memory_space<vmem>>, vector<8x32xbf16>,
    %c0_4 = arith.constant 0 : index
    %c0_5 = arith.constant 0 : index
    %c0_6 = arith.constant 0 : index
    %4 = vector.load %arg3[%c0_4, %c0_5, %c0_6] : memref<1x16x32xf32, #tpu.memory_space<vmem>>, vector<1x16x32xf32>
    %5 = vector.shape_cast %4 : vector<1x16x32xf32> to vector<16x32xf32>
    %6 = arith.truncf %5 : vector<16x32xf32> to vector<16x32xbf16>
    %c8 = arith.constant 8 : index
    %c0_7 = arith.constant 0 : index
    %7 = vector.load %arg16[%c8, %c0_7] : memref<32x32xbf16, #tpu.memory_space<vmem>>, vector<16x32xbf16>
    tpu.vector_store %arg16[%c8, %c0_7], %6 {strides = array<i32>} : memref<32x32xbf16, #tpu.memory_space<vmem>>, vector<16x32xbf16>,
    %c0_8 = arith.constant 0 : index
    %c0_9 = arith.constant 0 : index
    %c0_10 = arith.constant 0 : index
    %8 = vector.load %arg4[%c0_8, %c0_9, %c0_10] : memref<1x8x32xf32, #tpu.memory_space<vmem>>, vector<1x8x32xf32>
    %9 = vector.shape_cast %8 : vector<1x8x32xf32> to vector<8x32xf32>
    %10 = arith.truncf %9 : vector<8x32xf32> to vector<8x32xbf16>
    %c24 = arith.constant 24 : index
    %c0_11 = arith.constant 0 : index
    %11 = vector.load %arg16[%c24, %c0_11] : memref<32x32xbf16, #tpu.memory_space<vmem>>, vector<8x32xbf16>
    tpu.vector_store %arg16[%c24, %c0_11], %10 {strides = array<i32>} : memref<32x32xbf16, #tpu.memory_space<vmem>>, vector<8x32xbf16>,
    %c0_12 = arith.constant 0 : index
    %c0_13 = arith.constant 0 : index
    %12 = vector.load %arg16[%c0_12, %c0_13] : memref<32x32xbf16, #tpu.memory_space<vmem>>, vector<32x32xbf16>
    %c0_14 = arith.constant 0 : index
    %c0_15 = arith.constant 0 : index
    %13 = vector.load %arg5[%c0_14, %c0_15] : memref<32x128xbf16, #tpu.memory_space<vmem>>, vector<32x128xbf16>
    %cst = arith.constant dense<0.000000e+00> : vector<32x128xf32>
    %14 = tpu.matmul %12, %13, %cst {dimension_numbers = #tpu.dot_dimension_numbers<[1], [0], [0], [1], [0, 0, 1, 1], [], []>} : vector<32x32xbf16>, vector<32x128xbf16>, vector<32x128xf32> -> vector<32x128xf32>
    %c0_16 = arith.constant 0 : index
    %c0_17 = arith.constant 0 : index
    %15 = vector.load %arg6[%c0_16, %c0_17] : memref<1x128xf32, #tpu.memory_space<vmem>>, vector<1x128xf32>
    %16 = vector.broadcast %15 : vector<1x128xf32> to vector<32x128xf32>
    %17 = arith.addf %14, %16 : vector<32x128xf32>
    %c0_18 = arith.constant 0 : index
    %c0_19 = arith.constant 0 : index
    %18 = vector.load %arg7[%c0_18, %c0_19] : memref<32x128xbf16, #tpu.memory_space<vmem>>, vector<32x128xbf16>
    %cst_20 = arith.constant dense<0.000000e+00> : vector<32x128xf32>
    %19 = tpu.matmul %12, %18, %cst_20 {dimension_numbers = #tpu.dot_dimension_numbers<[1], [0], [0], [1], [0, 0, 1, 1], [], []>} : vector<32x32xbf16>, vector<32x128xbf16>, vector<32x128xf32> -> vector<32x128xf32>
    %c0_21 = arith.constant 0 : index
    %c0_22 = arith.constant 0 : index
    %20 = vector.load %arg8[%c0_21, %c0_22] : memref<1x128xf32, #tpu.memory_space<vmem>>, vector<1x128xf32>
    %21 = vector.broadcast %20 : vector<1x128xf32> to vector<32x128xf32>
    %22 = arith.addf %19, %21 : vector<32x128xf32>
    %cst_23 = arith.constant 0.000000e+00 : f32
    %23 = vector.broadcast %cst_23 : f32 to vector<32x128xf32>
    %24 = arith.subf %23, %22 : vector<32x128xf32>
    %25 = math.exp %24 : vector<32x128xf32>
    %cst_24 = arith.constant 1.000000e+00 : f32
    %26 = vector.broadcast %cst_24 : f32 to vector<32x128xf32>
    %27 = arith.addf %26, %25 : vector<32x128xf32>
    %28 = tpu.reciprocal %27 {approx = true} : vector<32x128xf32> -> vector<32x128xf32>
    %29 = arith.mulf %17, %28 : vector<32x128xf32>
    %c0_25 = arith.constant 0 : index
    %c0_26 = arith.constant 0 : index
    %30 = vector.load %arg17[%c0_25, %c0_26] : memref<32x128xf32, #tpu.memory_space<vmem>>, vector<32x128xf32>
    tpu.vector_store %arg17[%c0_25, %c0_26], %29 {strides = array<i32>} : memref<32x128xf32, #tpu.memory_space<vmem>>, vector<32x128xf32>,
    %c0_i32 = arith.constant 0 : i32
    %31 = arith.cmpi eq, %arg1, %c0_i32 : i32
    %32 = arith.extui %31 : i1 to i32
    %c0_i32_27 = arith.constant 0 : i32
    %33 = arith.cmpi ne, %32, %c0_i32_27 : i32
    scf.if %33 {
      %cst_58 = arith.constant 0.000000e+00 : f32
      %161 = vector.broadcast %cst_58 : f32 to vector<8x128xf32>
      %c0_59 = arith.constant 0 : index
      %c0_60 = arith.constant 0 : index
      %162 = vector.load %arg17[%c0_59, %c0_60] : memref<32x128xf32, #tpu.memory_space<vmem>>, vector<8x128xf32>
      tpu.vector_store %arg17[%c0_59, %c0_60], %161 {strides = array<i32>} : memref<32x128xf32, #tpu.memory_space<vmem>>, vector<8x128xf32>,
    } else {
    }
    %c1_i32 = arith.constant 1 : i32
    %34 = arith.addi %arg1, %c1_i32 : i32
    %c16_i32 = arith.constant 16 : i32
    %35 = arith.muli %34, %c16_i32 : i32
    %c8_i32 = arith.constant 8 : i32
    %36 = arith.addi %35, %c8_i32 : i32
    %c16_i32_28 = arith.constant 16 : i32
    %37 = arith.cmpi sgt, %36, %c16_i32_28 : i32
    %38 = arith.extui %37 : i1 to i32
    %c0_i32_29 = arith.constant 0 : i32
    %39 = arith.cmpi ne, %38, %c0_i32_29 : i32
    scf.if %39 {
      %161 = tpu.iota {dimensions = array<i32: 0>} : vector<32x1xi32>
      %c16_i32_58 = arith.constant 16 : i32
      %162 = arith.muli %arg1, %c16_i32_58 : i32
      %c8_i32_59 = arith.constant 8 : i32
      %163 = arith.subi %162, %c8_i32_59 : i32
      %164 = vector.broadcast %163 : i32 to vector<32x1xi32>
      %165 = arith.addi %164, %161 : vector<32x1xi32>
      %c16_i32_60 = arith.constant 16 : i32
      %166 = vector.broadcast %c16_i32_60 : i32 to vector<32x1xi32>
      %167 = arith.cmpi slt, %165, %166 : vector<32x1xi32>
      %c0_61 = arith.constant 0 : index
      %c0_62 = arith.constant 0 : index
      %168 = vector.load %arg17[%c0_61, %c0_62] : memref<32x128xf32, #tpu.memory_space<vmem>>, vector<32x128xf32>
      %cst_63 = arith.constant 0.000000e+00 : f32
      %169 = vector.shape_cast %167 : vector<32x1xi1> to vector<32x1xi1>
      %170 = vector.broadcast %169 : vector<32x1xi1> to vector<32x128xi1>
      %171 = vector.broadcast %cst_63 : f32 to vector<32x128xf32>
      %172 = arith.select %170, %168, %171 : vector<32x128xi1>, vector<32x128xf32>
      %c0_64 = arith.constant 0 : index
      %c0_65 = arith.constant 0 : index
      %173 = vector.load %arg17[%c0_64, %c0_65] : memref<32x128xf32, #tpu.memory_space<vmem>>, vector<32x128xf32>
      tpu.vector_store %arg17[%c0_64, %c0_65], %172 {strides = array<i32>} : memref<32x128xf32, #tpu.memory_space<vmem>>, vector<32x128xf32>,
    } else {
    }
    %c0_30 = arith.constant 0 : index
    %c0_31 = arith.constant 0 : index
    %40 = vector.load %arg9[%c0_30, %c0_31] : memref<15x128xf32, #tpu.memory_space<vmem>>, vector<15x128xf32>
    %c0_32 = arith.constant 0 : index
    %c0_33 = arith.constant 0 : index
    %41 = vector.load %arg10[%c0_32, %c0_33] : memref<1x128xf32, #tpu.memory_space<vmem>>, vector<1x128xf32>
    %c0_34 = arith.constant 0 : index
    %c0_35 = arith.constant 0 : index
    %42 = vector.load %arg11[%c0_34, %c0_35] : memref<1x128xf32, #tpu.memory_space<vmem>>, vector<1x128xf32>
    %c0_36 = arith.constant 0 : index
    %c0_37 = arith.constant 0 : index
    %43 = vector.load %arg12[%c0_36, %c0_37] : memref<1x128xf32, #tpu.memory_space<vmem>>, vector<1x128xf32>
    %44 = tpu.iota {dimensions = array<i32: 1>} : vector<1x128xi32>
    %c32_i32 = arith.constant 32 : i32
    %45 = vector.broadcast %c32_i32 : i32 to vector<1x128xi32>
    %46 = arith.cmpi slt, %44, %45 : vector<1x128xi32>
    %47 = arith.extui %46 : vector<1x128xi1> to vector<1x128xi32>
    %48 = arith.sitofp %47 : vector<1x128xi32> to vector<1x128xf32>
    %c0_38 = arith.constant 0 : index
    %c0_39 = arith.constant 0 : index
    %49 = vector.load %arg17[%c0_38, %c0_39] : memref<32x128xf32, #tpu.memory_space<vmem>>, vector<32x128xf32>
    %50 = vector.extract_strided_slice %49 {offsets = [1, 0], sizes = [16, 128], strides = [1, 1]} : vector<32x128xf32> to vector<16x128xf32>
    %51 = vector.extract_strided_slice %40 {offsets = [0, 0], sizes = [1, 128], strides = [1, 1]} : vector<15x128xf32> to vector<1x128xf32>
    %52 = vector.broadcast %51 : vector<1x128xf32> to vector<16x128xf32>
    %53 = arith.mulf %50, %52 : vector<16x128xf32>
    %54 = vector.extract_strided_slice %49 {offsets = [2, 0], sizes = [16, 128], strides = [1, 1]} : vector<32x128xf32> to vector<16x128xf32>
    %55 = vector.extract_strided_slice %40 {offsets = [1, 0], sizes = [1, 128], strides = [1, 1]} : vector<15x128xf32> to vector<1x128xf32>
    %56 = vector.broadcast %55 : vector<1x128xf32> to vector<16x128xf32>
    %57 = arith.mulf %54, %56 : vector<16x128xf32>
    %58 = arith.addf %53, %57 : vector<16x128xf32>
    %59 = vector.extract_strided_slice %49 {offsets = [3, 0], sizes = [16, 128], strides = [1, 1]} : vector<32x128xf32> to vector<16x128xf32>
    %60 = vector.extract_strided_slice %40 {offsets = [2, 0], sizes = [1, 128], strides = [1, 1]} : vector<15x128xf32> to vector<1x128xf32>
    %61 = vector.broadcast %60 : vector<1x128xf32> to vector<16x128xf32>
    %62 = arith.mulf %59, %61 : vector<16x128xf32>
    %63 = arith.addf %58, %62 : vector<16x128xf32>
    %64 = vector.extract_strided_slice %49 {offsets = [4, 0], sizes = [16, 128], strides = [1, 1]} : vector<32x128xf32> to vector<16x128xf32>
    %65 = vector.extract_strided_slice %40 {offsets = [3, 0], sizes = [1, 128], strides = [1, 1]} : vector<15x128xf32> to vector<1x128xf32>
    %66 = vector.broadcast %65 : vector<1x128xf32> to vector<16x128xf32>
    %67 = arith.mulf %64, %66 : vector<16x128xf32>
    %68 = arith.addf %63, %67 : vector<16x128xf32>
    %69 = vector.extract_strided_slice %49 {offsets = [5, 0], sizes = [16, 128], strides = [1, 1]} : vector<32x128xf32> to vector<16x128xf32>
    %70 = vector.extract_strided_slice %40 {offsets = [4, 0], sizes = [1, 128], strides = [1, 1]} : vector<15x128xf32> to vector<1x128xf32>
    %71 = vector.broadcast %70 : vector<1x128xf32> to vector<16x128xf32>
    %72 = arith.mulf %69, %71 : vector<16x128xf32>
    %73 = arith.addf %68, %72 : vector<16x128xf32>
    %74 = vector.extract_strided_slice %49 {offsets = [6, 0], sizes = [16, 128], strides = [1, 1]} : vector<32x128xf32> to vector<16x128xf32>
    %75 = vector.extract_strided_slice %40 {offsets = [5, 0], sizes = [1, 128], strides = [1, 1]} : vector<15x128xf32> to vector<1x128xf32>
    %76 = vector.broadcast %75 : vector<1x128xf32> to vector<16x128xf32>
    %77 = arith.mulf %74, %76 : vector<16x128xf32>
    %78 = arith.addf %73, %77 : vector<16x128xf32>
    %79 = vector.extract_strided_slice %49 {offsets = [7, 0], sizes = [16, 128], strides = [1, 1]} : vector<32x128xf32> to vector<16x128xf32>
    %80 = vector.extract_strided_slice %40 {offsets = [6, 0], sizes = [1, 128], strides = [1, 1]} : vector<15x128xf32> to vector<1x128xf32>
    %81 = vector.broadcast %80 : vector<1x128xf32> to vector<16x128xf32>
    %82 = arith.mulf %79, %81 : vector<16x128xf32>
    %83 = arith.addf %78, %82 : vector<16x128xf32>
    %84 = vector.extract_strided_slice %49 {offsets = [8, 0], sizes = [16, 128], strides = [1, 1]} : vector<32x128xf32> to vector<16x128xf32>
    %85 = vector.extract_strided_slice %40 {offsets = [7, 0], sizes = [1, 128], strides = [1, 1]} : vector<15x128xf32> to vector<1x128xf32>
    %86 = vector.broadcast %85 : vector<1x128xf32> to vector<16x128xf32>
    %87 = arith.mulf %84, %86 : vector<16x128xf32>
    %88 = arith.addf %83, %87 : vector<16x128xf32>
    %89 = vector.extract_strided_slice %49 {offsets = [9, 0], sizes = [16, 128], strides = [1, 1]} : vector<32x128xf32> to vector<16x128xf32>
    %90 = vector.extract_strided_slice %40 {offsets = [8, 0], sizes = [1, 128], strides = [1, 1]} : vector<15x128xf32> to vector<1x128xf32>
    %91 = vector.broadcast %90 : vector<1x128xf32> to vector<16x128xf32>
    %92 = arith.mulf %89, %91 : vector<16x128xf32>
    %93 = arith.addf %88, %92 : vector<16x128xf32>
    %94 = vector.extract_strided_slice %49 {offsets = [10, 0], sizes = [16, 128], strides = [1, 1]} : vector<32x128xf32> to vector<16x128xf32>
    %95 = vector.extract_strided_slice %40 {offsets = [9, 0], sizes = [1, 128], strides = [1, 1]} : vector<15x128xf32> to vector<1x128xf32>
    %96 = vector.broadcast %95 : vector<1x128xf32> to vector<16x128xf32>
    %97 = arith.mulf %94, %96 : vector<16x128xf32>
    %98 = arith.addf %93, %97 : vector<16x128xf32>
    %99 = vector.extract_strided_slice %49 {offsets = [11, 0], sizes = [16, 128], strides = [1, 1]} : vector<32x128xf32> to vector<16x128xf32>
    %100 = vector.extract_strided_slice %40 {offsets = [10, 0], sizes = [1, 128], strides = [1, 1]} : vector<15x128xf32> to vector<1x128xf32>
    %101 = vector.broadcast %100 : vector<1x128xf32> to vector<16x128xf32>
    %102 = arith.mulf %99, %101 : vector<16x128xf32>
    %103 = arith.addf %98, %102 : vector<16x128xf32>
    %104 = vector.extract_strided_slice %49 {offsets = [12, 0], sizes = [16, 128], strides = [1, 1]} : vector<32x128xf32> to vector<16x128xf32>
    %105 = vector.extract_strided_slice %40 {offsets = [11, 0], sizes = [1, 128], strides = [1, 1]} : vector<15x128xf32> to vector<1x128xf32>
    %106 = vector.broadcast %105 : vector<1x128xf32> to vector<16x128xf32>
    %107 = arith.mulf %104, %106 : vector<16x128xf32>
    %108 = arith.addf %103, %107 : vector<16x128xf32>
    %109 = vector.extract_strided_slice %49 {offsets = [13, 0], sizes = [16, 128], strides = [1, 1]} : vector<32x128xf32> to vector<16x128xf32>
    %110 = vector.extract_strided_slice %40 {offsets = [12, 0], sizes = [1, 128], strides = [1, 1]} : vector<15x128xf32> to vector<1x128xf32>
    %111 = vector.broadcast %110 : vector<1x128xf32> to vector<16x128xf32>
    %112 = arith.mulf %109, %111 : vector<16x128xf32>
    %113 = arith.addf %108, %112 : vector<16x128xf32>
    %114 = vector.extract_strided_slice %49 {offsets = [14, 0], sizes = [16, 128], strides = [1, 1]} : vector<32x128xf32> to vector<16x128xf32>
    %115 = vector.extract_strided_slice %40 {offsets = [13, 0], sizes = [1, 128], strides = [1, 1]} : vector<15x128xf32> to vector<1x128xf32>
    %116 = vector.broadcast %115 : vector<1x128xf32> to vector<16x128xf32>
    %117 = arith.mulf %114, %116 : vector<16x128xf32>
    %118 = arith.addf %113, %117 : vector<16x128xf32>
    %119 = vector.extract_strided_slice %49 {offsets = [15, 0], sizes = [16, 128], strides = [1, 1]} : vector<32x128xf32> to vector<16x128xf32>
    %120 = vector.extract_strided_slice %40 {offsets = [14, 0], sizes = [1, 128], strides = [1, 1]} : vector<15x128xf32> to vector<1x128xf32>
    %121 = vector.broadcast %120 : vector<1x128xf32> to vector<16x128xf32>
    %122 = arith.mulf %119, %121 : vector<16x128xf32>
    %123 = arith.addf %118, %122 : vector<16x128xf32>
    %124 = vector.broadcast %41 : vector<1x128xf32> to vector<16x128xf32>
    %125 = arith.addf %123, %124 : vector<16x128xf32>
    %cst_40 = arith.constant dense<0.000000e+00> : vector<16xf32>
    %126 = vector.multi_reduction <add>, %125, %cst_40 [1] : vector<16x128xf32> to vector<16xf32>
    %127 = vector.shape_cast %126 : vector<16xf32> to vector<16x1xf32>
    %cst_41 = arith.constant 3.125000e-02 : f32
    %128 = vector.broadcast %cst_41 : f32 to vector<16x1xf32>
    %129 = arith.mulf %127, %128 : vector<16x1xf32>
    %130 = vector.broadcast %129 : vector<16x1xf32> to vector<16x128xf32>
    %131 = arith.subf %125, %130 : vector<16x128xf32>
    %132 = vector.broadcast %48 : vector<1x128xf32> to vector<16x128xf32>
    %133 = arith.mulf %131, %132 : vector<16x128xf32>
    %134 = arith.mulf %133, %133 : vector<16x128xf32>
    %cst_42 = arith.constant dense<0.000000e+00> : vector<16xf32>
    %135 = vector.multi_reduction <add>, %134, %cst_42 [1] : vector<16x128xf32> to vector<16xf32>
    %136 = vector.shape_cast %135 : vector<16xf32> to vector<16x1xf32>
    %cst_43 = arith.constant 3.125000e-02 : f32
    %137 = vector.broadcast %cst_43 : f32 to vector<16x1xf32>
    %138 = arith.mulf %136, %137 : vector<16x1xf32>
    %cst_44 = arith.constant 9.99999974E-6 : f32
    %139 = vector.broadcast %cst_44 : f32 to vector<16x1xf32>
    %140 = arith.addf %138, %139 : vector<16x1xf32>
    %141 = math.rsqrt %140 : vector<16x1xf32>
    %142 = vector.broadcast %141 : vector<16x1xf32> to vector<16x128xf32>
    %143 = arith.mulf %133, %142 : vector<16x128xf32>
    %144 = vector.broadcast %42 : vector<1x128xf32> to vector<16x128xf32>
    %145 = arith.mulf %143, %144 : vector<16x128xf32>
    %146 = vector.broadcast %43 : vector<1x128xf32> to vector<16x128xf32>
    %147 = arith.addf %145, %146 : vector<16x128xf32>
    %cst_45 = arith.constant 0.000000e+00 : f32
    %148 = vector.broadcast %cst_45 : f32 to vector<16x128xf32>
    %149 = arith.maximumf %147, %148 : vector<16x128xf32>
    %150 = arith.truncf %149 : vector<16x128xf32> to vector<16x128xbf16>
    %c0_46 = arith.constant 0 : index
    %c0_47 = arith.constant 0 : index
    %151 = vector.load %arg18[%c0_46, %c0_47] : memref<16x128xbf16, #tpu.memory_space<vmem>>, vector<16x128xbf16>
    tpu.vector_store %arg18[%c0_46, %c0_47], %150 {strides = array<i32>} : memref<16x128xbf16, #tpu.memory_space<vmem>>, vector<16x128xbf16>,
    %c0_48 = arith.constant 0 : index
    %c0_49 = arith.constant 0 : index
    %152 = vector.load %arg18[%c0_48, %c0_49] : memref<16x128xbf16, #tpu.memory_space<vmem>>, vector<16x128xbf16>
    %c0_50 = arith.constant 0 : index
    %c0_51 = arith.constant 0 : index
    %153 = vector.load %arg13[%c0_50, %c0_51] : memref<128x32xbf16, #tpu.memory_space<vmem>>, vector<128x32xbf16>
    %cst_52 = arith.constant dense<0.000000e+00> : vector<16x32xf32>
    %154 = tpu.matmul %152, %153, %cst_52 {dimension_numbers = #tpu.dot_dimension_numbers<[1], [0], [0], [1], [0, 0, 1, 1], [], []>} : vector<16x128xbf16>, vector<128x32xbf16>, vector<16x32xf32> -> vector<16x32xf32>
    %c0_53 = arith.constant 0 : index
    %c0_54 = arith.constant 0 : index
    %155 = vector.load %arg14[%c0_53, %c0_54] : memref<1x32xf32, #tpu.memory_space<vmem>>, vector<1x32xf32>
    %156 = vector.broadcast %155 : vector<1x32xf32> to vector<16x32xf32>
    %157 = arith.addf %154, %156 : vector<16x32xf32>
    %c0_55 = arith.constant 0 : index
    %c0_56 = arith.constant 0 : index
    %c0_57 = arith.constant 0 : index
    %158 = vector.load %arg15[%c0_55, %c0_56, %c0_57] : memref<1x16x32xf32, #tpu.memory_space<vmem>>, vector<1x16x32xf32>
    %159 = vector.shape_cast %158 : vector<1x16x32xf32> to vector<16x32xf32>
    %160 = vector.shape_cast %157 : vector<16x32xf32> to vector<1x16x32xf32>
    tpu.vector_store %arg15[%c0_55, %c0_56, %c0_57], %160 {strides = array<i32>} : memref<1x16x32xf32, #tpu.memory_space<vmem>>, vector<1x16x32xf32>,
    return
  }
  func.func @transform_0(%arg0: i32, %arg1: i32) -> (i32, i32, i32) {
    %c2_i32 = arith.constant 2 : i32
    %0 = arith.muli %arg1, %c2_i32 : i32
    %c1_i32 = arith.constant 1 : i32
    %1 = arith.subi %0, %c1_i32 : i32
    %c0_i32 = arith.constant 0 : i32
    %2 = arith.maxsi %1, %c0_i32 : i32
    %c0_i32_0 = arith.constant 0 : i32
    %c0_i32_1 = arith.constant 0 : i32
    return %arg0, %2, %c0_i32_0 : i32, i32, i32
  }
  func.func @transform_1(%arg0: i32, %arg1: i32) -> (i32, i32, i32) {
    %c0_i32 = arith.constant 0 : i32
    %c0_i32_0 = arith.constant 0 : i32
    return %arg0, %arg1, %c0_i32 : i32, i32, i32
  }
  func.func @transform_2(%arg0: i32, %arg1: i32) -> (i32, i32, i32) {
    %c1_i32 = arith.constant 1 : i32
    %0 = arith.addi %arg1, %c1_i32 : i32
    %c2_i32 = arith.constant 2 : i32
    %1 = arith.muli %0, %c2_i32 : i32
    %c1_i32_0 = arith.constant 1 : i32
    %2 = arith.minsi %1, %c1_i32_0 : i32
    %c0_i32 = arith.constant 0 : i32
    %c0_i32_1 = arith.constant 0 : i32
    return %arg0, %2, %c0_i32 : i32, i32, i32
  }
  func.func @transform_3(%arg0: i32, %arg1: i32) -> (i32, i32) {
    %c0_i32 = arith.constant 0 : i32
    %c0_i32_0 = arith.constant 0 : i32
    %c0_i32_1 = arith.constant 0 : i32
    return %c0_i32, %c0_i32_0 : i32, i32
  }
  func.func @transform_4(%arg0: i32, %arg1: i32) -> (i32, i32) {
    %c0_i32 = arith.constant 0 : i32
    %c0_i32_0 = arith.constant 0 : i32
    %c0_i32_1 = arith.constant 0 : i32
    return %c0_i32, %c0_i32_0 : i32, i32
  }
  func.func @transform_5(%arg0: i32, %arg1: i32) -> (i32, i32) {
    %c0_i32 = arith.constant 0 : i32
    %c0_i32_0 = arith.constant 0 : i32
    %c0_i32_1 = arith.constant 0 : i32
    return %c0_i32, %c0_i32_0 : i32, i32
  }
  func.func @transform_6(%arg0: i32, %arg1: i32) -> (i32, i32) {
    %c0_i32 = arith.constant 0 : i32
    %c0_i32_0 = arith.constant 0 : i32
    %c0_i32_1 = arith.constant 0 : i32
    return %c0_i32, %c0_i32_0 : i32, i32
  }
  func.func @transform_7(%arg0: i32, %arg1: i32) -> (i32, i32) {
    %c0_i32 = arith.constant 0 : i32
    %c0_i32_0 = arith.constant 0 : i32
    %c0_i32_1 = arith.constant 0 : i32
    return %c0_i32, %c0_i32_0 : i32, i32
  }
  func.func @transform_8(%arg0: i32, %arg1: i32) -> (i32, i32) {
    %c0_i32 = arith.constant 0 : i32
    %c0_i32_0 = arith.constant 0 : i32
    %c0_i32_1 = arith.constant 0 : i32
    return %c0_i32, %c0_i32_0 : i32, i32
  }
  func.func @transform_9(%arg0: i32, %arg1: i32) -> (i32, i32) {
    %c0_i32 = arith.constant 0 : i32
    %c0_i32_0 = arith.constant 0 : i32
    %c0_i32_1 = arith.constant 0 : i32
    return %c0_i32, %c0_i32_0 : i32, i32
  }
  func.func @transform_10(%arg0: i32, %arg1: i32) -> (i32, i32) {
    %c0_i32 = arith.constant 0 : i32
    %c0_i32_0 = arith.constant 0 : i32
    %c0_i32_1 = arith.constant 0 : i32
    return %c0_i32, %c0_i32_0 : i32, i32
  }
  func.func @transform_11(%arg0: i32, %arg1: i32) -> (i32, i32) {
    %c0_i32 = arith.constant 0 : i32
    %c0_i32_0 = arith.constant 0 : i32
    %c0_i32_1 = arith.constant 0 : i32
    return %c0_i32, %c0_i32_0 : i32, i32
  }
  func.func @transform_12(%arg0: i32, %arg1: i32) -> (i32, i32) {
    %c0_i32 = arith.constant 0 : i32
    %c0_i32_0 = arith.constant 0 : i32
    %c0_i32_1 = arith.constant 0 : i32
    return %c0_i32, %c0_i32_0 : i32, i32
  }
  func.func @transform_13(%arg0: i32, %arg1: i32) -> (i32, i32, i32) {
    %c0_i32 = arith.constant 0 : i32
    %c0_i32_0 = arith.constant 0 : i32
    return %arg0, %arg1, %c0_i32 : i32, i32, i32
  }
}

</mosaic_0001>

<llo_original>
// kernel: tpu_custom_call.1
$region0: #{tpu_custom_call.1}
  #allocation0 [shape = 'u32[]', space=smem, size = 0x4, offset = 0x4, fixed_abs, tag = 'smem constant byte address 0x4 - core index']
  #allocation1 [shape = 'u32[144,128]{1,0:T(1,128)}', space=vmem, size = 0x12000, scoped, tag = 'internal scratch']
  #allocation2 [shape = 'bf16[32,32]{1,0:T(16,128)(2,1)}', space=vmem, size = 0x2000, scoped, tag = 'scratch operand']
  #allocation3 [shape = 'f32[32,128]{1,0:T(8,128)}', space=vmem, size = 0x4000, scoped, tag = 'scratch operand']
  #allocation4 [shape = 'bf16[16,128]{1,0:T(16,128)(2,1)}', space=vmem, size = 0x1000, scoped, tag = 'scratch operand']
  %s0 = inlined_call_operand.vmem [shape: f32[2,16,32], index: 0, kind: input, shape index: {}]
  %s1 = inlined_call_operand.vmem [shape: f32[2,16,32], index: 1, kind: input, shape index: {}]
  %s2 = inlined_call_operand.hbm [shape: f32[2,16,32], index: 2, kind: input, shape index: {}]
  %s3 = inlined_call_operand.vmem [shape: bf16[32,128], index: 3, kind: input, shape index: {}]
  %s4 = inlined_call_operand.vmem [shape: f32[1,128], index: 4, kind: input, shape index: {}]
  %s5 = inlined_call_operand.hbm [shape: bf16[32,128], index: 5, kind: input, shape index: {}]
  %s6 = inlined_call_operand.vmem [shape: f32[1,128], index: 6, kind: input, shape index: {}]
  %s7 = inlined_call_operand.hbm [shape: f32[15,128], index: 7, kind: input, shape index: {}]
  %s8 = inlined_call_operand.vmem [shape: f32[1,128], index: 8, kind: input, shape index: {}]
  %s9 = inlined_call_operand.vmem [shape: f32[1,128], index: 9, kind: input, shape index: {}]
  %s10 = inlined_call_operand.vmem [shape: f32[1,128], index: 10, kind: input, shape index: {}]
  %s11 = inlined_call_operand.vmem [shape: bf16[128,32], index: 11, kind: input, shape index: {}]
  %s12 = inlined_call_operand.vmem [shape: f32[1,32], index: 12, kind: input, shape index: {}]
  %s13 = inlined_call_operand.hbm [shape: f32[2,16,32], index: 13, kind: output, shape index: {}]
  %s14 = sld [smem:[#allocation0]]
  $region105: #{tpu_custom_call.1} parent=0
    _
  %s16 = ssub.s32 1, %s14
  %s17 = scalar_select 0, %s16, %s14
  $region1: #{tpu_custom_call.1} parent=0
    #allocation5 [shape = 'u8[8192]{0}', space=vmem, size = 0x2000, scoped, tag = 'input window, operand 2']
    #allocation6 [shape = 's32[2]{0}', space=sflag, size = 0x8, scoped, tag = 'scoped memory for tpu_custom_call.1']
    #allocation7 [shape = 's32[2]{0}', space=sflag, size = 0x8, scoped, tag = 'scoped memory for tpu_custom_call.1']
    #allocation8 [shape = 'u8[8192]{0}', space=vmem, size = 0x2000, scoped, tag = 'input window, operand 5, single buffered']
    #allocation9 [shape = 's32[1]{0}', space=sflag, size = 0x4, scoped, tag = 'scoped memory for tpu_custom_call.1']
    #allocation10 [shape = 'u8[8192]{0}', space=vmem, size = 0x2000, scoped, tag = 'input window, operand 7, single buffered']
    #allocation11 [shape = 'u8[16384]{0}', space=vmem, size = 0x4000, scoped, tag = 'output window, operand 0']
    %18 = vsyncpa [#allocation6], 0
    %s19 = scalar_lea.sflag [#allocation6], 1
    %20 = vsyncpa %s19, 0
    %21 = vsyncpa [#allocation9], 0
    %22 = vsyncpa [#allocation7], 0
    %s23 = scalar_lea.sflag [#allocation7], 1
    %24 = vsyncpa %s23, 0
    loop: start=0, step=1, limit=4
    $region2: #{tpu_custom_call.1} parent=1 // loop_pre_header
      _
    $region3: #{tpu_custom_call.1} parent=1 // loop_header
      %s26 = sphi 0, %s30
      %p27 = scmp.ge.s32.totalorder %s26, 4
      %s33 = sphi 0, %s45
      %s34 = sphi 0, %s41
      %s35 = sphi 0, %s33
      %s36 = sphi 0, %s34
      %s37 = sphi 0, %s35
      %s38 = sphi 0, %s36
      %s58 = sphi 0, %s60
      %s61 = sphi 0, %s58
      %s62 = sphi 0, %s61
      %s78 = sphi 0, %s62
      %s86 = sphi 0, %s88
      %s89 = sphi 0, %s86
      %s90 = sphi 0, %s89
      %s106 = sphi 0, %s90
      %s122 = sphi 0, %s124
      %s125 = sphi 0, %s122
      %s126 = sphi 0, %s125
      %s142 = sphi 0, %s126
      %s146 = sphi 0, %s146
      %s148 = sphi 0, %s146
      %s149 = sphi 0, %s148
      %s163 = sphi 0, %s149
      %s167 = sphi 0, %s167
      %s169 = sphi 0, %s167
      %s170 = sphi 0, %s169
      %s184 = sphi 0, %s170
      %s188 = sphi 0, %s188
      %s190 = sphi 0, %s188
      %s191 = sphi 0, %s190
      %s205 = sphi 0, %s191
      %s209 = sphi 0, %s209
      %s211 = sphi 0, %s209
      %s212 = sphi 0, %s211
      %s226 = sphi 0, %s212
      %s230 = sphi 0, %s230
      %s232 = sphi 0, %s230
      %s233 = sphi 0, %s232
      %s247 = sphi 0, %s233
      %s251 = sphi 0, %s251
      %s253 = sphi 0, %s251
      %s254 = sphi 0, %s253
      %s268 = sphi 0, %s254
      %s272 = sphi 0, %s272
      %s274 = sphi 0, %s272
      %s275 = sphi 0, %s274
      %s289 = sphi 0, %s275
      %s293 = sphi 0, %s293
      %s295 = sphi 0, %s293
      %s296 = sphi 0, %s295
      %s310 = sphi 0, %s296
      %s314 = sphi 0, %s314
      %s316 = sphi 0, %s314
      %s317 = sphi 0, %s316
      %s331 = sphi 0, %s317
      %s335 = sphi 0, %s335
      %s337 = sphi 0, %s335
      %s338 = sphi 0, %s337
      %s352 = sphi 0, %s338
      %s360 = sphi 0, %s362
      %s363 = sphi 0, %s360
      %s364 = sphi 0, %s363
      %s380 = sphi 0, %s364
    $region4: #{tpu_custom_call.1} parent=1 // loop_header_branch
      %29 = sbr.rel (%p27) target = $region8
    $region5: #{tpu_custom_call.1} parent=1 // loop_body
      %s31 = ssub.s32 %s26, 1
      %s32 = ssub.s32 %s26, 2
      %s39 = sadd.s32 1, %s34
      %p40 = scmp.ge.s32.totalorder %s39, 1
      %s41 = scalar_select %p40, 0, %s39
      %s42 = sadd.s32 1, %s33
      %s43 = scalar_select %p40, %s42, %s33
      %p44 = scmp.ge.s32.totalorder %s43, 2
      %s45 = scalar_select %p44, 0, %s43
      %s46 = smul.u32 %s34, 2
      %s47 = ssub.s32 %s46, 1
      %p48 = scmp.gt.s32.totalorder %s47, 0
      %s49 = scalar_select %p48, %s47, 0
      %s50 = smul.u32 %s41, 2
      %s51 = ssub.s32 %s50, 1
      %p52 = scmp.gt.s32.totalorder %s51, 0
      %s53 = scalar_select %p52, %s51, 0
      %s54 = ssub.s32 %s33, %s45
      %s55 = ssub.s32 %s49, %s53
      %s56 = sor.u32 %s54, %s55
      %p57 = scmp.eq.s32.totalorder %s56, 0
      %s59 = sadd.s32 %s58, 1
      %s60 = scalar_select %p57, %s58, %s59
      %p63 = pneg %p57
      %p64 = scmp.eq.s32.totalorder %s26, 1
      %p65 = por %p63, %p64
      %p66 = scmp.ne.s32.totalorder %s58, %s61
      %p67 = scmp.eq.s32.totalorder %s26, 0
      %p68 = por %p66, %p67
      %p69 = scmp.ne.s32.totalorder %s58, %s61
      %p70 = scmp.eq.s32.totalorder %s31, 1
      %p71 = por %p69, %p70
      %p72 = scmp.ne.s32.totalorder %s61, %s62
      %p73 = scmp.eq.s32.totalorder %s31, 0
      %p74 = por %p72, %p73
      %p75 = scmp.ne.s32.totalorder %s61, %s62
      %p76 = scmp.eq.s32.totalorder %s32, 1
      %p77 = por %p75, %p76
      %p79 = scmp.ne.s32.totalorder %s62, %s78
      %p80 = scmp.eq.s32.totalorder %s32, 0
      %p81 = por %p79, %p80
      %s82 = ssub.s32 %s33, %s45
      %s83 = ssub.s32 %s34, %s41
      %s84 = sor.u32 %s82, %s83
      %p85 = scmp.eq.s32.totalorder %s84, 0
      %s87 = sadd.s32 %s86, 1
      %s88 = scalar_select %p85, %s86, %s87
      %p91 = pneg %p85
      %p92 = scmp.eq.s32.totalorder %s26, 1
      %p93 = por %p91, %p92
      %p94 = scmp.ne.s32.totalorder %s86, %s89
      %p95 = scmp.eq.s32.totalorder %s26, 0
      %p96 = por %p94, %p95
      %p97 = scmp.ne.s32.totalorder %s86, %s89
      %p98 = scmp.eq.s32.totalorder %s31, 1
      %p99 = por %p97, %p98
      %p100 = scmp.ne.s32.totalorder %s89, %s90
      %p101 = scmp.eq.s32.totalorder %s31, 0
      %p102 = por %p100, %p101
      %p103 = scmp.ne.s32.totalorder %s89, %s90
      %p104 = scmp.eq.s32.totalorder %s32, 1
      %p105 = por %p103, %p104
      %p107 = scmp.ne.s32.totalorder %s90, %s106
      %p108 = scmp.eq.s32.totalorder %s32, 0
      %p109 = por %p107, %p108
      %s110 = sadd.s32 %s34, 1
      %s111 = smul.u32 %s110, 2
      %p112 = scmp.lt.s32.totalorder %s111, 1
      %s113 = scalar_select %p112, %s111, 1
      %s114 = sadd.s32 %s41, 1
      %s115 = smul.u32 %s114, 2
      %p116 = scmp.lt.s32.totalorder %s115, 1
      %s117 = scalar_select %p116, %s115, 1
      %s118 = ssub.s32 %s33, %s45
      %s119 = ssub.s32 %s113, %s117
      %s120 = sor.u32 %s118, %s119
      %p121 = scmp.eq.s32.totalorder %s120, 0
      %s123 = sadd.s32 %s122, 1
      %s124 = scalar_select %p121, %s122, %s123
      %p127 = pneg %p121
      %p128 = scmp.eq.s32.totalorder %s26, 1
      %p129 = por %p127, %p128
      %p130 = scmp.ne.s32.totalorder %s122, %s125
      %p131 = scmp.eq.s32.totalorder %s26, 0
      %p132 = por %p130, %p131
      %p133 = scmp.ne.s32.totalorder %s122, %s125
      %p134 = scmp.eq.s32.totalorder %s31, 1
      %p135 = por %p133, %p134
      %p136 = scmp.ne.s32.totalorder %s125, %s126
      %p137 = scmp.eq.s32.totalorder %s31, 0
      %p138 = por %p136, %p137
      %p139 = scmp.ne.s32.totalorder %s125, %s126
      %p140 = scmp.eq.s32.totalorder %s32, 1
      %p141 = por %p139, %p140
      %p143 = scmp.ne.s32.totalorder %s126, %s142
      %p144 = scmp.eq.s32.totalorder %s32, 0
      %p145 = por %p143, %p144
      %s147 = sadd.s32 %s146, 1
      %p150 = scmp.eq.s32.totalorder %s26, 1
      %p151 = scmp.ne.s32.totalorder %s146, %s148
      %p152 = scmp.eq.s32.totalorder %s26, 0
      %p153 = por %p151, %p152
      %p154 = scmp.ne.s32.totalorder %s146, %s148
      %p155 = scmp.eq.s32.totalorder %s31, 1
      %p156 = por %p154, %p155
      %p157 = scmp.ne.s32.totalorder %s148, %s149
      %p158 = scmp.eq.s32.totalorder %s31, 0
      %p159 = por %p157, %p158
      %p160 = scmp.ne.s32.totalorder %s148, %s149
      %p161 = scmp.eq.s32.totalorder %s32, 1
      %p162 = por %p160, %p161
      %p164 = scmp.ne.s32.totalorder %s149, %s163
      %p165 = scmp.eq.s32.totalorder %s32, 0
      %p166 = por %p164, %p165
      %s168 = sadd.s32 %s167, 1
      %p171 = scmp.eq.s32.totalorder %s26, 1
      %p172 = scmp.ne.s32.totalorder %s167, %s169
      %p173 = scmp.eq.s32.totalorder %s26, 0
      %p174 = por %p172, %p173
      %p175 = scmp.ne.s32.totalorder %s167, %s169
      %p176 = scmp.eq.s32.totalorder %s31, 1
      %p177 = por %p175, %p176
      %p178 = scmp.ne.s32.totalorder %s169, %s170
      %p179 = scmp.eq.s32.totalorder %s31, 0
      %p180 = por %p178, %p179
      %p181 = scmp.ne.s32.totalorder %s169, %s170
      %p182 = scmp.eq.s32.totalorder %s32, 1
      %p183 = por %p181, %p182
      %p185 = scmp.ne.s32.totalorder %s170, %s184
      %p186 = scmp.eq.s32.totalorder %s32, 0
      %p187 = por %p185, %p186
      %s189 = sadd.s32 %s188, 1
      %p192 = scmp.eq.s32.totalorder %s26, 1
      %p193 = scmp.ne.s32.totalorder %s188, %s190
      %p194 = scmp.eq.s32.totalorder %s26, 0
      %p195 = por %p193, %p194
      %p196 = scmp.ne.s32.totalorder %s188, %s190
      %p197 = scmp.eq.s32.totalorder %s31, 1
      %p198 = por %p196, %p197
      %p199 = scmp.ne.s32.totalorder %s190, %s191
      %p200 = scmp.eq.s32.totalorder %s31, 0
      %p201 = por %p199, %p200
      %p202 = scmp.ne.s32.totalorder %s190, %s191
      %p203 = scmp.eq.s32.totalorder %s32, 1
      %p204 = por %p202, %p203
      %p206 = scmp.ne.s32.totalorder %s191, %s205
      %p207 = scmp.eq.s32.totalorder %s32, 0
      %p208 = por %p206, %p207
      %s210 = sadd.s32 %s209, 1
      %p213 = scmp.eq.s32.totalorder %s26, 1
      %p214 = scmp.ne.s32.totalorder %s209, %s211
      %p215 = scmp.eq.s32.totalorder %s26, 0
      %p216 = por %p214, %p215
      %p217 = scmp.ne.s32.totalorder %s209, %s211
      %p218 = scmp.eq.s32.totalorder %s31, 1
      %p219 = por %p217, %p218
      %p220 = scmp.ne.s32.totalorder %s211, %s212
      %p221 = scmp.eq.s32.totalorder %s31, 0
      %p222 = por %p220, %p221
      %p223 = scmp.ne.s32.totalorder %s211, %s212
      %p224 = scmp.eq.s32.totalorder %s32, 1
      %p225 = por %p223, %p224
      %p227 = scmp.ne.s32.totalorder %s212, %s226
      %p228 = scmp.eq.s32.totalorder %s32, 0
      %p229 = por %p227, %p228
      %s231 = sadd.s32 %s230, 1
      %p234 = scmp.eq.s32.totalorder %s26, 1
      %p235 = scmp.ne.s32.totalorder %s230, %s232
      %p236 = scmp.eq.s32.totalorder %s26, 0
      %p237 = por %p235, %p236
      %p238 = scmp.ne.s32.totalorder %s230, %s232
      %p239 = scmp.eq.s32.totalorder %s31, 1
      %p240 = por %p238, %p239
      %p241 = scmp.ne.s32.totalorder %s232, %s233
      %p242 = scmp.eq.s32.totalorder %s31, 0
      %p243 = por %p241, %p242
      %p244 = scmp.ne.s32.totalorder %s232, %s233
      %p245 = scmp.eq.s32.totalorder %s32, 1
      %p246 = por %p244, %p245
      %p248 = scmp.ne.s32.totalorder %s233, %s247
      %p249 = scmp.eq.s32.totalorder %s32, 0
      %p250 = por %p248, %p249
      %s252 = sadd.s32 %s251, 1
      %p255 = scmp.eq.s32.totalorder %s26, 1
      %p256 = scmp.ne.s32.totalorder %s251, %s253
      %p257 = scmp.eq.s32.totalorder %s26, 0
      %p258 = por %p256, %p257
      %p259 = scmp.ne.s32.totalorder %s251, %s253
      %p260 = scmp.eq.s32.totalorder %s31, 1
      %p261 = por %p259, %p260
      %p262 = scmp.ne.s32.totalorder %s253, %s254
      %p263 = scmp.eq.s32.totalorder %s31, 0
      %p264 = por %p262, %p263
      %p265 = scmp.ne.s32.totalorder %s253, %s254
      %p266 = scmp.eq.s32.totalorder %s32, 1
      %p267 = por %p265, %p266
      %p269 = scmp.ne.s32.totalorder %s254, %s268
      %p270 = scmp.eq.s32.totalorder %s32, 0
      %p271 = por %p269, %p270
      %s273 = sadd.s32 %s272, 1
      %p276 = scmp.eq.s32.totalorder %s26, 1
      %p277 = scmp.ne.s32.totalorder %s272, %s274
      %p278 = scmp.eq.s32.totalorder %s26, 0
      %p279 = por %p277, %p278
      %p280 = scmp.ne.s32.totalorder %s272, %s274
      %p281 = scmp.eq.s32.totalorder %s31, 1
      %p282 = por %p280, %p281
      %p283 = scmp.ne.s32.totalorder %s274, %s275
      %p284 = scmp.eq.s32.totalorder %s31, 0
      %p285 = por %p283, %p284
      %p286 = scmp.ne.s32.totalorder %s274, %s275
      %p287 = scmp.eq.s32.totalorder %s32, 1
      %p288 = por %p286, %p287
      %p290 = scmp.ne.s32.totalorder %s275, %s289
      %p291 = scmp.eq.s32.totalorder %s32, 0
      %p292 = por %p290, %p291
      %s294 = sadd.s32 %s293, 1
      %p297 = scmp.eq.s32.totalorder %s26, 1
      %p298 = scmp.ne.s32.totalorder %s293, %s295
      %p299 = scmp.eq.s32.totalorder %s26, 0
      %p300 = por %p298, %p299
      %p301 = scmp.ne.s32.totalorder %s293, %s295
      %p302 = scmp.eq.s32.totalorder %s31, 1
      %p303 = por %p301, %p302
      %p304 = scmp.ne.s32.totalorder %s295, %s296
      %p305 = scmp.eq.s32.totalorder %s31, 0
      %p306 = por %p304, %p305
      %p307 = scmp.ne.s32.totalorder %s295, %s296
      %p308 = scmp.eq.s32.totalorder %s32, 1
      %p309 = por %p307, %p308
      %p311 = scmp.ne.s32.totalorder %s296, %s310
      %p312 = scmp.eq.s32.totalorder %s32, 0
      %p313 = por %p311, %p312
      %s315 = sadd.s32 %s314, 1
      %p318 = scmp.eq.s32.totalorder %s26, 1
      %p319 = scmp.ne.s32.totalorder %s314, %s316
      %p320 = scmp.eq.s32.totalorder %s26, 0
      %p321 = por %p319, %p320
      %p322 = scmp.ne.s32.totalorder %s314, %s316
      %p323 = scmp.eq.s32.totalorder %s31, 1
      %p324 = por %p322, %p323
      %p325 = scmp.ne.s32.totalorder %s316, %s317
      %p326 = scmp.eq.s32.totalorder %s31, 0
      %p327 = por %p325, %p326
      %p328 = scmp.ne.s32.totalorder %s316, %s317
      %p329 = scmp.eq.s32.totalorder %s32, 1
      %p330 = por %p328, %p329
      %p332 = scmp.ne.s32.totalorder %s317, %s331
      %p333 = scmp.eq.s32.totalorder %s32, 0
      %p334 = por %p332, %p333
      %s336 = sadd.s32 %s335, 1
      %p339 = scmp.eq.s32.totalorder %s26, 1
      %p340 = scmp.ne.s32.totalorder %s335, %s337
      %p341 = scmp.eq.s32.totalorder %s26, 0
      %p342 = por %p340, %p341
      %p343 = scmp.ne.s32.totalorder %s335, %s337
      %p344 = scmp.eq.s32.totalorder %s31, 1
      %p345 = por %p343, %p344
      %p346 = scmp.ne.s32.totalorder %s337, %s338
      %p347 = scmp.eq.s32.totalorder %s31, 0
      %p348 = por %p346, %p347
      %p349 = scmp.ne.s32.totalorder %s337, %s338
      %p350 = scmp.eq.s32.totalorder %s32, 1
      %p351 = por %p349, %p350
      %p353 = scmp.ne.s32.totalorder %s338, %s352
      %p354 = scmp.eq.s32.totalorder %s32, 0
      %p355 = por %p353, %p354
      %s356 = ssub.s32 %s33, %s45
      %s357 = ssub.s32 %s34, %s41
      %s358 = sor.u32 %s356, %s357
      %p359 = scmp.eq.s32.totalorder %s358, 0
      %s361 = sadd.s32 %s360, 1
      %s362 = scalar_select %p359, %s360, %s361
      %p365 = pneg %p359
      %p366 = scmp.eq.s32.totalorder %s26, 1
      %p367 = por %p365, %p366
      %p368 = scmp.ne.s32.totalorder %s360, %s363
      %p369 = scmp.eq.s32.totalorder %s26, 0
      %p370 = por %p368, %p369
      %p371 = scmp.ne.s32.totalorder %s360, %s363
      %p372 = scmp.eq.s32.totalorder %s31, 1
      %p373 = por %p371, %p372
      %p374 = scmp.ne.s32.totalorder %s363, %s364
      %p375 = scmp.eq.s32.totalorder %s31, 0
      %p376 = por %p374, %p375
      %p377 = scmp.ne.s32.totalorder %s363, %s364
      %p378 = scmp.eq.s32.totalorder %s32, 1
      %p379 = por %p377, %p378
      %p381 = scmp.ne.s32.totalorder %s364, %s380
      %p382 = scmp.eq.s32.totalorder %s32, 0
      %p383 = por %p381, %p382
      %p384 = scmp.le.s32.totalorder 1, %s26
      %p385 = scmp.lt.s32.totalorder %s26, 3
      %p386 = pnand %p384, %p385
      %p387 = pneg %p386
      // Predicated region
      $region9: #{tpu_custom_call.1} parent=5 // pred_check
        _
      $region10: #{tpu_custom_call.1} parent=5 // pred_check_branch
        %389 = sbr.rel (%p386) target = $region12
      $region11: #{tpu_custom_call.1} parent=5 // pred_region
        %s390 = ssub.s32 %s26, 1
        // Predicated region
        $region13: #{tpu_custom_call.1} parent=11 // pred_check
          %p391 = pneg %p159
        $region14: #{tpu_custom_call.1} parent=11 // pred_check_branch
          %393 = sbr.rel (%p391) target = $region16
        $region15: #{tpu_custom_call.1} parent=11 // pred_region
          _
        $region16: #{tpu_custom_call.1} parent=11 // pred_fallthru
          _
        // Predicated region
        $region17: #{tpu_custom_call.1} parent=11 // pred_check
          %p394 = pneg %p180
        $region18: #{tpu_custom_call.1} parent=11 // pred_check_branch
          %396 = sbr.rel (%p394) target = $region20
        $region19: #{tpu_custom_call.1} parent=11 // pred_region
          _
        $region20: #{tpu_custom_call.1} parent=11 // pred_fallthru
          _
        // Predicated region
        $region21: #{tpu_custom_call.1} parent=11 // pred_check
          %p397 = pneg %p201
        $region22: #{tpu_custom_call.1} parent=11 // pred_check_branch
          %399 = sbr.rel (%p397) target = $region24
        $region23: #{tpu_custom_call.1} parent=11 // pred_region
          %s401 = ssub.s32 256, 256
          %402 = vsyncadd [#allocation9], %s401
          %s403 = sshll.u32 [#allocation8], 4
          %s404 = int_to_ptr.vmem [resolvable:$true] %s403
          %409 = dma.hbm_to_vmem [thread:$0]  %s5, 256, %s404, [#allocation9], 64, 64, 4
        $region24: #{tpu_custom_call.1} parent=11 // pred_fallthru
          _
        // Predicated region
        $region25: #{tpu_custom_call.1} parent=11 // pred_check
          %p410 = pneg %p222
        $region26: #{tpu_custom_call.1} parent=11 // pred_check_branch
          %412 = sbr.rel (%p410) target = $region28
        $region27: #{tpu_custom_call.1} parent=11 // pred_region
          _
        $region28: #{tpu_custom_call.1} parent=11 // pred_fallthru
          _
        // Predicated region
        $region29: #{tpu_custom_call.1} parent=11 // pred_check
          %p413 = pneg %p243
        $region30: #{tpu_custom_call.1} parent=11 // pred_check_branch
          %415 = sbr.rel (%p413) target = $region32
        $region31: #{tpu_custom_call.1} parent=11 // pred_region
          %s417 = ssub.s32 256, 256
          %418 = vsyncadd [#allocation9], %s417
          %s419 = sshll.u32 [#allocation10], 4
          %s420 = int_to_ptr.vmem [resolvable:$true] %s419
          %425 = dma.hbm_to_vmem [thread:$0]  %s7, 256, %s420, [#allocation9], 128, 128, 8
        $region32: #{tpu_custom_call.1} parent=11 // pred_fallthru
          _
        // Predicated region
        $region33: #{tpu_custom_call.1} parent=11 // pred_check
          %p426 = pneg %p264
        $region34: #{tpu_custom_call.1} parent=11 // pred_check_branch
          %428 = sbr.rel (%p426) target = $region36
        $region35: #{tpu_custom_call.1} parent=11 // pred_region
          _
        $region36: #{tpu_custom_call.1} parent=11 // pred_fallthru
          _
        // Predicated region
        $region37: #{tpu_custom_call.1} parent=11 // pred_check
          %p429 = pneg %p285
        $region38: #{tpu_custom_call.1} parent=11 // pred_check_branch
          %431 = sbr.rel (%p429) target = $region40
        $region39: #{tpu_custom_call.1} parent=11 // pred_region
          _
        $region40: #{tpu_custom_call.1} parent=11 // pred_fallthru
          _
        // Predicated region
        $region41: #{tpu_custom_call.1} parent=11 // pred_check
          %p432 = pneg %p306
        $region42: #{tpu_custom_call.1} parent=11 // pred_check_branch
          %434 = sbr.rel (%p432) target = $region44
        $region43: #{tpu_custom_call.1} parent=11 // pred_region
          _
        $region44: #{tpu_custom_call.1} parent=11 // pred_fallthru
          _
        // Predicated region
        $region45: #{tpu_custom_call.1} parent=11 // pred_check
          %p435 = pneg %p327
        $region46: #{tpu_custom_call.1} parent=11 // pred_check_branch
          %437 = sbr.rel (%p435) target = $region48
        $region47: #{tpu_custom_call.1} parent=11 // pred_region
          _
        $region48: #{tpu_custom_call.1} parent=11 // pred_fallthru
          _
        // Predicated region
        $region49: #{tpu_custom_call.1} parent=11 // pred_check
          %p438 = pneg %p348
        $region50: #{tpu_custom_call.1} parent=11 // pred_check_branch
          %440 = sbr.rel (%p438) target = $region52
        $region51: #{tpu_custom_call.1} parent=11 // pred_region
          _
        $region52: #{tpu_custom_call.1} parent=11 // pred_fallthru
          _
      $region12: #{tpu_custom_call.1} parent=5 // pred_fallthru
        _
      %p441 = scmp.lt.s32.totalorder %s26, 2
      // Predicated region
      $region53: #{tpu_custom_call.1} parent=5 // pred_check
        %p442 = pneg %p441
      $region54: #{tpu_custom_call.1} parent=5 // pred_check_branch
        %444 = sbr.rel (%p442) target = $region56
      $region55: #{tpu_custom_call.1} parent=5 // pred_region
        // Predicated region
        $region57: #{tpu_custom_call.1} parent=55 // pred_check
          %p445 = pneg %p68
        $region58: #{tpu_custom_call.1} parent=55 // pred_check_branch
          %447 = sbr.rel (%p445) target = $region60
        $region59: #{tpu_custom_call.1} parent=55 // pred_region
          %s448 = smul.u32 %s34, 2
          %s449 = ssub.s32 %s448, 1
          %p450 = scmp.gt.s32.totalorder %s449, 0
          %s451 = scalar_select %p450, %s449, 0
          %p452 = scmp.lt.s32.totalorder %s33, 1
          %s453 = scalar_select %p452, %s33, 1
          %p454 = scmp.lt.s32.totalorder %s451, 1
          %s455 = scalar_select %p454, %s451, 1
          %s456 = smul.addr %s453, 2
          %s457 = sadd.s32 %s455, %s456
          %s458 = smul.addr %s457, 8
          %s459 = scalar_lea.vmem %s0, %s458
          %s460 = smul.u32 %s34, 2
          %s461 = ssub.s32 %s460, 1
          %p462 = scmp.gt.s32.totalorder %s461, 0
          %s463 = scalar_select %p462, %s461, 0
        $region60: #{tpu_custom_call.1} parent=55 // pred_fallthru
          _
        // Predicated region
        $region61: #{tpu_custom_call.1} parent=55 // pred_check
          %p464 = pneg %p96
        $region62: #{tpu_custom_call.1} parent=55 // pred_check_branch
          %466 = sbr.rel (%p464) target = $region64
        $region63: #{tpu_custom_call.1} parent=55 // pred_region
          %s467 = smul.u32 2, %s34
          %p468 = scmp.lt.s32.totalorder %s33, 1
          %s469 = scalar_select %p468, %s33, 1
          %p470 = scmp.lt.s32.totalorder %s467, 1
          %s471 = scalar_select %p470, %s467, 1
          %s472 = smul.addr %s469, 2
          %s473 = sadd.s32 %s471, %s472
          %s474 = smul.addr %s473, 8
          %s475 = scalar_lea.vmem %s1, %s474
          %s476 = smul.u32 2, %s34
        $region64: #{tpu_custom_call.1} parent=55 // pred_fallthru
          _
        // Predicated region
        $region65: #{tpu_custom_call.1} parent=55 // pred_check
          %p477 = pneg %p132
        $region66: #{tpu_custom_call.1} parent=55 // pred_check_branch
          %479 = sbr.rel (%p477) target = $region68
        $region67: #{tpu_custom_call.1} parent=55 // pred_region
          %s480 = sand.u32 %s122, 1
          %s481 = scalar_lea.sflag [#allocation6], %s480
          %s482 = sand.u32 %s122, 1
          %s483 = smul.addr %s482, 8
          %s484 = scalar_lea.vmem [#allocation5], %s483
          %s485 = sadd.s32 %s34, 1
          %s486 = smul.u32 %s485, 2
          %p487 = scmp.lt.s32.totalorder %s486, 1
          %s488 = scalar_select %p487, %s486, 1
          %s490 = ssub.s32 128, 128
          %491 = vsyncadd %s481, %s490
          %s492 = smul.addr %s33, 2
          %s493 = sadd.s32 %s488, %s492
          %s494 = smul.addr %s493, 128
          %s495 = scalar_lea.hbm %s2, %s494
          %s497 = sshll.u32 %s484, 4
          %s498 = int_to_ptr.vmem [resolvable:$true] %s497
          %500 = dma.hbm_to_vmem [thread:$0]  %s495, 128, %s498, %s481
        $region68: #{tpu_custom_call.1} parent=55 // pred_fallthru
          _
      $region56: #{tpu_custom_call.1} parent=5 // pred_fallthru
        _
      %p501 = scmp.le.s32.totalorder 1, %s26
      %p502 = scmp.lt.s32.totalorder %s26, 3
      %p503 = pnand %p501, %p502
      %p504 = pneg %p503
      // Predicated region
      $region69: #{tpu_custom_call.1} parent=5 // pred_check
        _
      $region70: #{tpu_custom_call.1} parent=5 // pred_check_branch
        %506 = sbr.rel (%p503) target = $region72
      $region71: #{tpu_custom_call.1} parent=5 // pred_region
        %s507 = ssub.s32 %s26, 1
        %s508 = sand.u32 %s125, 1
        %s509 = scalar_lea.sflag [#allocation6], %s508
        %s510 = sand.u32 %s125, 1
        %s511 = smul.addr %s510, 8
        %s512 = scalar_lea.vmem [#allocation5], %s511
        // Predicated region
        $region73: #{tpu_custom_call.1} parent=71 // pred_check
          %p513 = pneg %p138
        $region74: #{tpu_custom_call.1} parent=71 // pred_check_branch
          %515 = sbr.rel (%p513) target = $region76
        $region75: #{tpu_custom_call.1} parent=71 // pred_region
          %516 = dma.done %s509, 128
        $region76: #{tpu_custom_call.1} parent=71 // pred_fallthru
          _
        // Predicated region
        $region77: #{tpu_custom_call.1} parent=71 // pred_check
          %p517 = pneg %p201
        $region78: #{tpu_custom_call.1} parent=71 // pred_check_branch
          %519 = sbr.rel (%p517) target = $region80
        $region79: #{tpu_custom_call.1} parent=71 // pred_region
          %520 = dma.done [#allocation9], 256
        $region80: #{tpu_custom_call.1} parent=71 // pred_fallthru
          _
        // Predicated region
        $region81: #{tpu_custom_call.1} parent=71 // pred_check
          %p521 = pneg %p243
        $region82: #{tpu_custom_call.1} parent=71 // pred_check_branch
          %523 = sbr.rel (%p521) target = $region84
        $region83: #{tpu_custom_call.1} parent=71 // pred_region
          %524 = dma.done [#allocation9], 256
        $region84: #{tpu_custom_call.1} parent=71 // pred_fallthru
          _
        %s525 = smul.u32 %s36, 2
        %s526 = ssub.s32 %s525, 1
        %p527 = scmp.gt.s32.totalorder %s526, 0
        %s528 = scalar_select %p527, %s526, 0
        %p529 = scmp.lt.s32.totalorder %s35, 1
        %s530 = scalar_select %p529, %s35, 1
        %p531 = scmp.lt.s32.totalorder %s528, 1
        %s532 = scalar_select %p531, %s528, 1
        %s533 = smul.addr %s530, 2
        %s534 = sadd.s32 %s532, %s533
        %s535 = smul.addr %s534, 8
        %s536 = scalar_lea.vmem %s0, %s535
        %p537 = pneg %p74
        %p538 = pneg %p71
        %s539 = smul.u32 2, %s36
        %p540 = scmp.lt.s32.totalorder %s35, 1
        %s541 = scalar_select %p540, %s35, 1
        %p542 = scmp.lt.s32.totalorder %s539, 1
        %s543 = scalar_select %p542, %s539, 1
        %s544 = smul.addr %s541, 2
        %s545 = sadd.s32 %s543, %s544
        %s546 = smul.addr %s545, 8
        %s547 = scalar_lea.vmem %s1, %s546
        %p548 = pneg %p102
        %p549 = pneg %p99
        %s550 = sand.u32 %s125, 1
        %s551 = scalar_lea.sflag [#allocation6], %s550
        %s552 = sand.u32 %s125, 1
        %s553 = smul.addr %s552, 8
        %s554 = scalar_lea.vmem [#allocation5], %s553
        %p555 = pneg %p138
        %p556 = pneg %p135
        %p557 = pneg %p159
        %p558 = pneg %p156
        %p559 = pneg %p180
        %p560 = pneg %p177
        %p561 = pneg %p201
        %p562 = pneg %p198
        %p563 = pneg %p222
        %p564 = pneg %p219
        %p565 = pneg %p243
        %p566 = pneg %p240
        %p567 = pneg %p264
        %p568 = pneg %p261
        %p569 = pneg %p285
        %p570 = pneg %p282
        %p571 = pneg %p306
        %p572 = pneg %p303
        %p573 = pneg %p327
        %p574 = pneg %p324
        %p575 = pneg %p348
        %p576 = pneg %p345
        %p577 = pneg %p376
        %p578 = pneg %p373
        %s579 = sand.u32 %s363, 1
        %s580 = scalar_lea.sflag [#allocation7], %s579
        %s581 = sand.u32 %s363, 1
        %s582 = smul.addr %s581, 16
        %s583 = scalar_lea.vmem [#allocation11], %s582
        %s584 = smul.u32 %s36, 2
        %s585 = ssub.s32 %s584, 1
        %p586 = scmp.gt.s32.totalorder %s585, 0
        %s587 = scalar_select %p586, %s585, 0
        %p588 = scmp.lt.s32.totalorder %s35, 1
        %s589 = scalar_select %p588, %s35, 1
        %p590 = scmp.lt.s32.totalorder %s587, 1
        %s591 = scalar_select %p590, %s587, 1
        %s592 = smul.addr %s589, 2
        %s593 = sadd.s32 %s591, %s592
        %s594 = smul.addr %s593, 8
        %s595 = scalar_lea.vmem %s0, %s594
        %s596 = smul.u32 %s36, 2
        %s597 = ssub.s32 %s596, 1
        %p598 = scmp.gt.s32.totalorder %s597, 0
        %s599 = scalar_select %p598, %s597, 0
        %s600 = smul.u32 2, %s36
        %p601 = scmp.lt.s32.totalorder %s35, 1
        %s602 = scalar_select %p601, %s35, 1
        %p603 = scmp.lt.s32.totalorder %s600, 1
        %s604 = scalar_select %p603, %s600, 1
        %s605 = smul.addr %s602, 2
        %s606 = sadd.s32 %s604, %s605
        %s607 = smul.addr %s606, 8
        %s608 = scalar_lea.vmem %s1, %s607
        %s609 = smul.u32 2, %s36
        %s610 = sadd.s32 %s36, 1
        %s611 = smul.u32 %s610, 2
        %p612 = scmp.lt.s32.totalorder %s611, 1
        %s613 = scalar_select %p612, %s611, 1
        %s614 = smul.u32 2, %s36
        %v616 = vld [vmem:[%s595] sm:$0xff]
        %v617 = vpack.c.bf16 %v616, %v616
        %vm618 = vcmask 257024
        %619 = vst.msk [vmem:[#allocation2] sm:$0xf] %vm618, %v617
        %v620 = vld [vmem:[%s608] sm:$0xff]
        %v621 = vld [vmem:[%s608 + $0x8] sm:$0xff]
        %v622 = vpack.c.bf16 %v621, %v620
        %v624 = vrot.slane %v622, 4
        %vm626 = vcmask 261124
        %627 = vst.msk [vmem:[#allocation2] sm:$0xf0] %vm626, %v624
        %628 = vst.msk [vmem:[#allocation2 + $0x8] sm:$0xf] %vm618, %v624
        %v629 = vld [vmem:[%s512] sm:$0xff]
        %v630 = vpack.c.bf16 %v629, %v629
        %v632 = vrot.slane %v630, 4
        %634 = vst.msk [vmem:[#allocation2 + $0x8] sm:$0xf0] %vm626, %v632
        %v635 = vld [vmem:[#allocation2] sm:$0xff]
        %v636 = vld [vmem:[#allocation2 + $0x8] sm:$0xff]
        %v637 = vld [vmem:[%s3] sm:$0xf]
        %v638 = vld [vmem:[%s3 + $0x4] sm:$0xf]
        %v639 = vld [vmem:[%s3 + $0x8] sm:$0xf]
        %v640 = vld [vmem:[%s3 + $0xc] sm:$0xf]
        %v641 = vld [vmem:[%s4] sm:$0x1]
        %v643 = vlaneseq
        %v644 = vshrl.u32 %v643, 7
        %v645 = vsub.s32 0, %v644
        %v646 = vrot.slane %v641, %v645
        %v652 = vunpack.c.l.b16 %v637
        %v653 = vunpack.c.l.b16 %v638
        %v654 = vunpack.c.l.b16 %v639
        %v655 = vunpack.c.l.b16 %v640
        %v656 = vpack.c.b16 %v653, %v652
        %v657 = vpack.c.b16 %v655, %v654
        %vm660 = vcmask 261120
        %v662 = vsel %vm660, %v635, 0
        %v665 = vsel %vm660, %v636, 0
        %667 = vmatprep.subr.bf16.mxu0 0
        %668 = vmatpush1.bf16.msra.mxu0 %v656
        %669 = vmatprep.subr.bf16.mxu0 0
        %670 = vmatpush1.bf16.msra.mxu0 %v657
        %671 = vmatprep.subr.bf16.mxu0 0
        %672 = vmatpush1.bf16.msra.mxu0 0
        %673 = vmatprep.subr.bf16.mxu0 0
        %674 = vmatpush1.bf16.msra.mxu0 0
        %675 = vmatprep.subr.bf16.mxu0 0
        %676 = vmatpush1.bf16.msra.mxu0 0
        %677 = vmatprep.subr.bf16.mxu0 0
        %678 = vmatpush1.bf16.msra.mxu0 0
        %679 = vmatprep.subr.bf16.mxu0 0
        %680 = vmatpush1.bf16.msra.mxu0 0
        %681 = vmatprep.subr.bf16.mxu0 0
        %682 = vmatpush1.bf16.msra.mxu0 0
        %683 = vmatprep.subr.bf16.mxu0 0
        %684 = vmatpush1.bf16.msra.mxu0 0
        %685 = vmatprep.subr.bf16.mxu0 0
        %686 = vmatpush1.bf16.msra.mxu0 0
        %687 = vmatprep.subr.bf16.mxu0 0
        %688 = vmatpush1.bf16.msra.mxu0 0
        %689 = vmatprep.subr.bf16.mxu0 0
        %690 = vmatpush1.bf16.msra.mxu0 0
        %691 = vmatprep.subr.bf16.mxu0 0
        %692 = vmatpush1.bf16.msra.mxu0 0
        %693 = vmatprep.subr.bf16.mxu0 0
        %694 = vmatpush1.bf16.msra.mxu0 0
        %695 = vmatprep.subr.bf16.mxu0 0
        %696 = vmatpush1.bf16.msra.mxu0 0
        %697 = vmatprep.subr.bf16.mxu0 0
        %698 = vmatpush1.bf16.msra.mxu0 0
        %699 = vmatprep.mubr.bf16.mxu0 0
        %700 = vmatmul.mubr.bf16.gmra.mrb[0].mxu0 %v662
        %v701 = vpop.f32.mrb[0].mxu0
        %v702 = vadd.f32 %v646, %v701
        %v703 = vpop.f32.mrb[0].mxu0
        %v704 = vpop.f32.mrb[0].mxu0
        %v705 = vadd.f32 %v646, %v704
        %v706 = vpop.f32.mrb[0].mxu0
        %707 = vmatprep.mubr.bf16.mxu0 0
        %708 = vmatmul.mubr.bf16.gmra.mrb[0].mxu0 %v665
        %v709 = vpop.f32.mrb[0].mxu0
        %v710 = vadd.f32 %v646, %v709
        %v711 = vpop.f32.mrb[0].mxu0
        %v712 = vpop.f32.mrb[0].mxu0
        %v713 = vadd.f32 %v646, %v712
        %v714 = vpop.f32.mrb[0].mxu0
        %715 = vdwg.mxu0
        %v716 = vld [vmem:[#allocation8] sm:$0xf]
        %v717 = vld [vmem:[#allocation8 + $0x4] sm:$0xf]
        %v718 = vld [vmem:[#allocation8 + $0x8] sm:$0xf]
        %v719 = vld [vmem:[#allocation8 + $0xc] sm:$0xf]
        %v720 = vld [vmem:[%s6] sm:$0x1]
        %v722 = vlaneseq
        %v723 = vshrl.u32 %v722, 7
        %v724 = vsub.s32 0, %v723
        %v725 = vrot.slane %v720, %v724
        %v731 = vunpack.c.l.b16 %v716
        %v732 = vunpack.c.l.b16 %v717
        %v733 = vunpack.c.l.b16 %v718
        %v734 = vunpack.c.l.b16 %v719
        %v735 = vpack.c.b16 %v732, %v731
        %v736 = vpack.c.b16 %v734, %v733
        %739 = vmatprep.subr.bf16.mxu0 0
        %740 = vmatpush1.bf16.msra.mxu0 %v735
        %741 = vmatprep.subr.bf16.mxu0 0
        %742 = vmatpush1.bf16.msra.mxu0 %v736
        %743 = vmatprep.subr.bf16.mxu0 0
        %744 = vmatpush1.bf16.msra.mxu0 0
        %745 = vmatprep.subr.bf16.mxu0 0
        %746 = vmatpush1.bf16.msra.mxu0 0
        %747 = vmatprep.subr.bf16.mxu0 0
        %748 = vmatpush1.bf16.msra.mxu0 0
        %749 = vmatprep.subr.bf16.mxu0 0
        %750 = vmatpush1.bf16.msra.mxu0 0
        %751 = vmatprep.subr.bf16.mxu0 0
        %752 = vmatpush1.bf16.msra.mxu0 0
        %753 = vmatprep.subr.bf16.mxu0 0
        %754 = vmatpush1.bf16.msra.mxu0 0
        %755 = vmatprep.subr.bf16.mxu0 0
        %756 = vmatpush1.bf16.msra.mxu0 0
        %757 = vmatprep.subr.bf16.mxu0 0
        %758 = vmatpush1.bf16.msra.mxu0 0
        %759 = vmatprep.subr.bf16.mxu0 0
        %760 = vmatpush1.bf16.msra.mxu0 0
        %761 = vmatprep.subr.bf16.mxu0 0
        %762 = vmatpush1.bf16.msra.mxu0 0
        %763 = vmatprep.subr.bf16.mxu0 0
        %764 = vmatpush1.bf16.msra.mxu0 0
        %765 = vmatprep.subr.bf16.mxu0 0
        %766 = vmatpush1.bf16.msra.mxu0 0
        %767 = vmatprep.subr.bf16.mxu0 0
        %768 = vmatpush1.bf16.msra.mxu0 0
        %769 = vmatprep.subr.bf16.mxu0 0
        %770 = vmatpush1.bf16.msra.mxu0 0
        %771 = vmatprep.mubr.bf16.mxu0 0
        %772 = vmatmul.mubr.bf16.gmra.mrb[0].mxu0 %v662
        %v773 = vpop.f32.mrb[0].mxu0
        %v774 = vadd.f32 %v725, %v773
        %v775 = vpop.f32.mrb[0].mxu0
        %v776 = vpop.f32.mrb[0].mxu0
        %v777 = vadd.f32 %v725, %v776
        %v778 = vpop.f32.mrb[0].mxu0
        %779 = vmatprep.mubr.bf16.mxu0 0
        %780 = vmatmul.mubr.bf16.gmra.mrb[0].mxu0 %v665
        %v781 = vpop.f32.mrb[0].mxu0
        %v782 = vadd.f32 %v725, %v781
        %v783 = vpop.f32.mrb[0].mxu0
        %v784 = vpop.f32.mrb[0].mxu0
        %v785 = vadd.f32 %v725, %v784
        %v786 = vpop.f32.mrb[0].mxu0
        %787 = vdwg.mxu0
        %v788 = vsub.f32 0.0, %v774
        %v789 = vsub.f32 0.0, %v777
        %v790 = vsub.f32 0.0, %v782
        %v791 = vsub.f32 0.0, %v785
        %v792 = vmul.f32 %v788, 1.442695
        %v793 = vpow.pop %v792
        %v794 = vmul.f32 %v789, 1.442695
        %v795 = vpow.pop %v794
        %v796 = vmul.f32 %v790, 1.442695
        %v797 = vpow.pop %v796
        %v798 = vmul.f32 %v791, 1.442695
        %v799 = vpow.pop %v798
        %v800 = vadd.f32 %v793, 1.0
        %v801 = vadd.f32 %v795, 1.0
        %v802 = vadd.f32 %v797, 1.0
        %v803 = vadd.f32 %v799, 1.0
        %v804 = vrcp.pop %v800
        %v805 = vrcp.pop %v801
        %v806 = vrcp.pop %v802
        %v807 = vrcp.pop %v803
        %v808 = vmul.f32 %v702, %v804
        %v809 = vmul.f32 %v705, %v805
        %v810 = vmul.f32 %v710, %v806
        %v811 = vmul.f32 %v713, %v807
        %812 = vst [vmem:[#allocation3] sm:$0xff] %v808
        %813 = vst [vmem:[#allocation3 + $0x8] sm:$0xff] %v809
        %814 = vst [vmem:[#allocation3 + $0x10] sm:$0xff] %v810
        %815 = vst [vmem:[#allocation3 + $0x18] sm:$0xff] %v811
        %p816 = scmp.eq.s32.totalorder %s36, 0
        // Predicated region
        $region85: #{tpu_custom_call.1} parent=71 // pred_check
          %p817 = pneg %p816
        $region86: #{tpu_custom_call.1} parent=71 // pred_check_branch
          %819 = sbr.rel (%p817) target = $region88
        $region87: #{tpu_custom_call.1} parent=71 // pred_region
          %820 = vst [vmem:[#allocation3] sm:$0xff] 0.0
        $region88: #{tpu_custom_call.1} parent=71 // pred_fallthru
          _
        %s821 = sadd.s32 %s36, 1
        %s822 = smul.u32 %s821, 16
        %s823 = sadd.s32 %s822, 8
        %p824 = scmp.gt.s32.totalorder %s823, 16
        // Predicated region
        $region89: #{tpu_custom_call.1} parent=71 // pred_check
          %p825 = pneg %p824
        $region90: #{tpu_custom_call.1} parent=71 // pred_check_branch
          %827 = sbr.rel (%p825) target = $region92
        $region91: #{tpu_custom_call.1} parent=71 // pred_region
          %v828 = vlaneseq
          %v829 = vshrl.u32 %v828, 7
          %v830 = vadd.s32 %v829, 8
          %v831 = vadd.s32 %v829, 16
          %v832 = vadd.s32 %v829, 24
          %s833 = smul.u32 %s36, 16
          %s834 = ssub.s32 %s833, 8
          %v835 = vstv %s834
          %v836 = vadd.s32 %v835, %v829
          %v837 = vadd.s32 %v835, %v830
          %v838 = vadd.s32 %v835, %v831
          %v839 = vadd.s32 %v835, %v832
          %vm840 = vcmp.lt.s32.totalorder %v836, 16
          %vm841 = vcmp.lt.s32.totalorder %v837, 16
          %vm842 = vcmp.lt.s32.totalorder %v838, 16
          %vm843 = vcmp.lt.s32.totalorder %v839, 16
          %v844 = vld [vmem:[#allocation3] sm:$0xff]
          %v845 = vld [vmem:[#allocation3 + $0x8] sm:$0xff]
          %v846 = vld [vmem:[#allocation3 + $0x10] sm:$0xff]
          %v847 = vld [vmem:[#allocation3 + $0x18] sm:$0xff]
          %v848 = vsel %vm840, 1, 0
          %v849 = vsel %vm841, 1, 0
          %v850 = vsel %vm842, 1, 0
          %v851 = vsel %vm843, 1, 0
          %vm852 = vcmp.eq.s32.totalorder %v848, 1
          %vm853 = vcmp.eq.s32.totalorder %v849, 1
          %vm854 = vcmp.eq.s32.totalorder %v850, 1
          %vm855 = vcmp.eq.s32.totalorder %v851, 1
          %v856 = vsel %vm852, %v844, 0.0
          %v857 = vsel %vm853, %v845, 0.0
          %v858 = vsel %vm854, %v846, 0.0
          %v859 = vsel %vm855, %v847, 0.0
          %860 = vst [vmem:[#allocation3] sm:$0xff] %v856
          %861 = vst [vmem:[#allocation3 + $0x8] sm:$0xff] %v857
          %862 = vst [vmem:[#allocation3 + $0x10] sm:$0xff] %v858
          %863 = vst [vmem:[#allocation3 + $0x18] sm:$0xff] %v859
        $region92: #{tpu_custom_call.1} parent=71 // pred_fallthru
          _
        %v864 = vld [vmem:[#allocation10] sm:$0xff]
        %v865 = vld [vmem:[#allocation10 + $0x8] sm:$0x7f]
        %v866 = vld [vmem:[%s8] sm:$0x1]
        %v867 = vld [vmem:[%s9] sm:$0x1]
        %v868 = vld [vmem:[%s10] sm:$0x1]
        %v869 = vlaneseq
        %v870 = vand.u32 %v869, 127
        %vm871 = vcmp.lt.s32.totalorder %v870, 32
        %v872 = vsel %vm871, 1, 0
        %v873 = vcvt.s32.f32 %v872
        %v874 = vld [vmem:[#allocation3] sm:$0xff]
        %v875 = vld [vmem:[#allocation3 + $0x8] sm:$0xff]
        %v876 = vld [vmem:[#allocation3 + $0x10] sm:$0xff]
        %v877 = vld [vmem:[#allocation3 + $0x18] sm:$0xff]
        %v878 = vlaneseq
        %v879 = vshrl.u32 %v878, 7
        %v880 = vsub.s32 0, %v879
        %v881 = vrot.slane %v864, %v880
        %v882 = vmul.f32 %v874, %v881
        %v883 = vmul.f32 %v875, %v881
        %v884 = vmul.f32 %v876, %v881
        %v885 = vlaneseq
        %v886 = vshrl.u32 %v885, 7
        %v887 = vsub.s32 1, %v886
        %v888 = vrot.slane %v864, %v887
        %v889 = vmul.f32 %v874, %v888
        %v890 = vmul.f32 %v875, %v888
        %v891 = vmul.f32 %v876, %v888
        %vm895 = vcmask 1046528
        %v896 = vrot.slane %v889, 1
        %v897 = vrot.slane %v890, 1
        %v898 = vsel %vm895, %v896, %v897
        %v899 = vrot.slane %v891, 1
        %v900 = vsel %vm895, %v897, %v899
        %v904 = vadd.f32 %v882, %v898
        %v905 = vadd.f32 %v883, %v900
        %v906 = vadd.f32 %v884, %v899
        %v907 = vlaneseq
        %v908 = vshrl.u32 %v907, 7
        %v909 = vsub.s32 2, %v908
        %v910 = vrot.slane %v864, %v909
        %v911 = vmul.f32 %v874, %v910
        %v912 = vmul.f32 %v875, %v910
        %v913 = vmul.f32 %v876, %v910
        %vm917 = vcmask 1045504
        %v918 = vrot.slane %v911, 2
        %v919 = vrot.slane %v912, 2
        %v920 = vsel %vm917, %v918, %v919
        %v921 = vrot.slane %v913, 2
        %v922 = vsel %vm917, %v919, %v921
        %v926 = vadd.f32 %v904, %v920
        %v927 = vadd.f32 %v905, %v922
        %v928 = vadd.f32 %v906, %v921
        %v929 = vlaneseq
        %v930 = vshrl.u32 %v929, 7
        %v931 = vsub.s32 3, %v930
        %v932 = vrot.slane %v864, %v931
        %v933 = vmul.f32 %v874, %v932
        %v934 = vmul.f32 %v875, %v932
        %v935 = vmul.f32 %v876, %v932
        %vm939 = vcmask 1044480
        %v940 = vrot.slane %v933, 3
        %v941 = vrot.slane %v934, 3
        %v942 = vsel %vm939, %v940, %v941
        %v943 = vrot.slane %v935, 3
        %v944 = vsel %vm939, %v941, %v943
        %v948 = vadd.f32 %v926, %v942
        %v949 = vadd.f32 %v927, %v944
        %v950 = vadd.f32 %v928, %v943
        %v951 = vlaneseq
        %v952 = vshrl.u32 %v951, 7
        %v953 = vsub.s32 4, %v952
        %v954 = vrot.slane %v864, %v953
        %v955 = vmul.f32 %v874, %v954
        %v956 = vmul.f32 %v875, %v954
        %v957 = vmul.f32 %v876, %v954
        %vm961 = vcmask 1043456
        %v962 = vrot.slane %v955, 4
        %v963 = vrot.slane %v956, 4
        %v964 = vsel %vm961, %v962, %v963
        %v965 = vrot.slane %v957, 4
        %v966 = vsel %vm961, %v963, %v965
        %v970 = vadd.f32 %v948, %v964
        %v971 = vadd.f32 %v949, %v966
        %v972 = vadd.f32 %v950, %v965
        %v973 = vlaneseq
        %v974 = vshrl.u32 %v973, 7
        %v975 = vsub.s32 5, %v974
        %v976 = vrot.slane %v864, %v975
        %v977 = vmul.f32 %v874, %v976
        %v978 = vmul.f32 %v875, %v976
        %v979 = vmul.f32 %v876, %v976
        %vm983 = vcmask 1042432
        %v984 = vrot.slane %v977, 5
        %v985 = vrot.slane %v978, 5
        %v986 = vsel %vm983, %v984, %v985
        %v987 = vrot.slane %v979, 5
        %v988 = vsel %vm983, %v985, %v987
        %v992 = vadd.f32 %v970, %v986
        %v993 = vadd.f32 %v971, %v988
        %v994 = vadd.f32 %v972, %v987
        %v995 = vlaneseq
        %v996 = vshrl.u32 %v995, 7
        %v997 = vsub.s32 6, %v996
        %v998 = vrot.slane %v864, %v997
        %v999 = vmul.f32 %v874, %v998
        %v1000 = vmul.f32 %v875, %v998
        %v1001 = vmul.f32 %v876, %v998
        %vm1005 = vcmask 1041408
        %v1006 = vrot.slane %v999, 6
        %v1007 = vrot.slane %v1000, 6
        %v1008 = vsel %vm1005, %v1006, %v1007
        %v1009 = vrot.slane %v1001, 6
        %v1010 = vsel %vm1005, %v1007, %v1009
        %v1014 = vadd.f32 %v992, %v1008
        %v1015 = vadd.f32 %v993, %v1010
        %v1016 = vadd.f32 %v994, %v1009
        %v1017 = vlaneseq
        %v1018 = vshrl.u32 %v1017, 7
        %v1019 = vsub.s32 7, %v1018
        %v1020 = vrot.slane %v864, %v1019
        %v1021 = vmul.f32 %v875, %v1020
        %v1022 = vmul.f32 %v876, %v1020
        %vm1025 = vcmask 1040384
        %v1026 = vrot.slane %v1021, 7
        %v1027 = vrot.slane %v1022, 7
        %v1028 = vsel %vm1025, %v1026, %v1027
        %v1032 = vadd.f32 %v1014, %v1026
        %v1033 = vadd.f32 %v1015, %v1028
        %v1034 = vadd.f32 %v1016, %v1027
        %v1035 = vlaneseq
        %v1036 = vshrl.u32 %v1035, 7
        %v1037 = vsub.s32 0, %v1036
        %v1038 = vrot.slane %v865, %v1037
        %v1039 = vmul.f32 %v875, %v1038
        %v1040 = vmul.f32 %v876, %v1038
        %v1041 = vmul.f32 %v877, %v1038
        %v1042 = vadd.f32 %v1032, %v1039
        %v1043 = vadd.f32 %v1033, %v1040
        %v1044 = vadd.f32 %v1034, %v1041
        %v1045 = vlaneseq
        %v1046 = vshrl.u32 %v1045, 7
        %v1047 = vsub.s32 1, %v1046
        %v1048 = vrot.slane %v865, %v1047
        %v1049 = vmul.f32 %v875, %v1048
        %v1050 = vmul.f32 %v876, %v1048
        %v1051 = vmul.f32 %v877, %v1048
        %v1055 = vrot.slane %v1049, 1
        %v1056 = vrot.slane %v1050, 1
        %v1057 = vsel %vm895, %v1055, %v1056
        %v1058 = vrot.slane %v1051, 1
        %v1059 = vsel %vm895, %v1056, %v1058
        %v1063 = vadd.f32 %v1042, %v1057
        %v1064 = vadd.f32 %v1043, %v1059
        %v1065 = vadd.f32 %v1044, %v1058
        %v1066 = vlaneseq
        %v1067 = vshrl.u32 %v1066, 7
        %v1068 = vsub.s32 2, %v1067
        %v1069 = vrot.slane %v865, %v1068
        %v1070 = vmul.f32 %v875, %v1069
        %v1071 = vmul.f32 %v876, %v1069
        %v1072 = vmul.f32 %v877, %v1069
        %v1076 = vrot.slane %v1070, 2
        %v1077 = vrot.slane %v1071, 2
        %v1078 = vsel %vm917, %v1076, %v1077
        %v1079 = vrot.slane %v1072, 2
        %v1080 = vsel %vm917, %v1077, %v1079
        %v1084 = vadd.f32 %v1063, %v1078
        %v1085 = vadd.f32 %v1064, %v1080
        %v1086 = vadd.f32 %v1065, %v1079
        %v1087 = vlaneseq
        %v1088 = vshrl.u32 %v1087, 7
        %v1089 = vsub.s32 3, %v1088
        %v1090 = vrot.slane %v865, %v1089
        %v1091 = vmul.f32 %v875, %v1090
        %v1092 = vmul.f32 %v876, %v1090
        %v1093 = vmul.f32 %v877, %v1090
        %v1097 = vrot.slane %v1091, 3
        %v1098 = vrot.slane %v1092, 3
        %v1099 = vsel %vm939, %v1097, %v1098
        %v1100 = vrot.slane %v1093, 3
        %v1101 = vsel %vm939, %v1098, %v1100
        %v1105 = vadd.f32 %v1084, %v1099
        %v1106 = vadd.f32 %v1085, %v1101
        %v1107 = vadd.f32 %v1086, %v1100
        %v1108 = vlaneseq
        %v1109 = vshrl.u32 %v1108, 7
        %v1110 = vsub.s32 4, %v1109
        %v1111 = vrot.slane %v865, %v1110
        %v1112 = vmul.f32 %v875, %v1111
        %v1113 = vmul.f32 %v876, %v1111
        %v1114 = vmul.f32 %v877, %v1111
        %v1118 = vrot.slane %v1112, 4
        %v1119 = vrot.slane %v1113, 4
        %v1120 = vsel %vm961, %v1118, %v1119
        %v1121 = vrot.slane %v1114, 4
        %v1122 = vsel %vm961, %v1119, %v1121
        %v1126 = vadd.f32 %v1105, %v1120
        %v1127 = vadd.f32 %v1106, %v1122
        %v1128 = vadd.f32 %v1107, %v1121
        %v1129 = vlaneseq
        %v1130 = vshrl.u32 %v1129, 7
        %v1131 = vsub.s32 5, %v1130
        %v1132 = vrot.slane %v865, %v1131
        %v1133 = vmul.f32 %v875, %v1132
        %v1134 = vmul.f32 %v876, %v1132
        %v1135 = vmul.f32 %v877, %v1132
        %v1139 = vrot.slane %v1133, 5
        %v1140 = vrot.slane %v1134, 5
        %v1141 = vsel %vm983, %v1139, %v1140
        %v1142 = vrot.slane %v1135, 5
        %v1143 = vsel %vm983, %v1140, %v1142
        %v1147 = vadd.f32 %v1126, %v1141
        %v1148 = vadd.f32 %v1127, %v1143
        %v1149 = vadd.f32 %v1128, %v1142
        %v1150 = vlaneseq
        %v1151 = vshrl.u32 %v1150, 7
        %v1152 = vsub.s32 6, %v1151
        %v1153 = vrot.slane %v865, %v1152
        %v1154 = vmul.f32 %v875, %v1153
        %v1155 = vmul.f32 %v876, %v1153
        %v1156 = vmul.f32 %v877, %v1153
        %v1160 = vrot.slane %v1154, 6
        %v1161 = vrot.slane %v1155, 6
        %v1162 = vsel %vm1005, %v1160, %v1161
        %v1163 = vrot.slane %v1156, 6
        %v1164 = vsel %vm1005, %v1161, %v1163
        %v1168 = vadd.f32 %v1147, %v1162
        %v1169 = vadd.f32 %v1148, %v1164
        %v1170 = vadd.f32 %v1149, %v1163
        %v1172 = vlaneseq
        %v1173 = vshrl.u32 %v1172, 7
        %v1174 = vsub.s32 0, %v1173
        %v1175 = vrot.slane %v866, %v1174
        %v1177 = vadd.f32 %v1168, %v1175
        %v1178 = vadd.f32 %v1169, %v1175
        %v1179 = vadd.f32 %v1170, %v1175
        %vm1180 = vcmask 1047553
        %v1181 = vsel %vm1180, %v1177, 0.0
        %1182 = vadd.xlane.f32.xlu0 %v1181
        %v1183 = vpop.xlane.xlu0 %1182
        %1184 = vadd.xlane.f32.xlu0 %v1178
        %v1185 = vpop.xlane.xlu0 %1184
        %v1186 = vsel %vm1025, %v1179, 0.0
        %1187 = vadd.xlane.f32.xlu0 %v1186
        %v1188 = vpop.xlane.xlu0 %1187
        %v1189 = vmul.f32 %v1183, 0.03125
        %v1190 = vmul.f32 %v1185, 0.03125
        %v1191 = vmul.f32 %v1188, 0.03125
        %v1192 = vsub.f32 %v1177, %v1189
        %v1193 = vsub.f32 %v1178, %v1190
        %v1194 = vsub.f32 %v1179, %v1191
        %v1195 = vmul.f32 %v1192, %v873
        %v1196 = vmul.f32 %v1193, %v873
        %v1197 = vmul.f32 %v1194, %v873
        %v1198 = vmul.f32 %v1195, %v1195
        %v1199 = vmul.f32 %v1196, %v1196
        %v1200 = vmul.f32 %v1197, %v1197
        %v1201 = vsel %vm1180, %v1198, 0.0
        %1202 = vadd.xlane.f32.xlu0 %v1201
        %v1203 = vpop.xlane.xlu0 %1202
        %1204 = vadd.xlane.f32.xlu0 %v1199
        %v1205 = vpop.xlane.xlu0 %1204
        %v1206 = vsel %vm1025, %v1200, 0.0
        %1207 = vadd.xlane.f32.xlu0 %v1206
        %v1208 = vpop.xlane.xlu0 %1207
        %v1209 = vmul.f32 %v1203, 0.03125
        %v1210 = vmul.f32 %v1205, 0.03125
        %v1211 = vmul.f32 %v1208, 0.03125
        %v1212 = vadd.f32 %v1209, 1e-05
        %v1213 = vadd.f32 %v1210, 1e-05
        %v1214 = vadd.f32 %v1211, 1e-05
        %v1215 = vrsqrt.pop %v1212
        %v1216 = vrsqrt.pop %v1213
        %v1217 = vrsqrt.pop %v1214
        %v1218 = vmul.f32 %v1195, %v1215
        %v1219 = vmul.f32 %v1196, %v1216
        %v1220 = vmul.f32 %v1197, %v1217
        %v1222 = vlaneseq
        %v1223 = vshrl.u32 %v1222, 7
        %v1224 = vsub.s32 0, %v1223
        %v1225 = vrot.slane %v867, %v1224
        %v1227 = vmul.f32 %v1218, %v1225
        %v1228 = vmul.f32 %v1219, %v1225
        %v1229 = vmul.f32 %v1220, %v1225
        %v1231 = vlaneseq
        %v1232 = vshrl.u32 %v1231, 7
        %v1233 = vsub.s32 0, %v1232
        %v1234 = vrot.slane %v868, %v1233
        %v1236 = vadd.f32 %v1227, %v1234
        %v1237 = vadd.f32 %v1228, %v1234
        %v1238 = vadd.f32 %v1229, %v1234
        %v1239 = vmax.f32 %v1236, 0.0
        %v1240 = vmax.f32 %v1237, 0.0
        %v1241 = vmax.f32 %v1238, 0.0
        %v1242 = vpack.c.bf16 %v1240, %v1239
        %v1243 = vpack.c.bf16 %v1241, %v1241
        %vm1244 = vsmask.f32 7424
        %v1246 = vshrl.u32 %v1242, 16
        %v1248 = vshll.u32 %v1242, 16
        %v1250 = vrot.slane %v1248, 1
        %v1251 = vor.u32 %v1246, %v1250
        %v1253 = vshll.u32 %v1243, 16
        %v1255 = vrot.slane %v1253, 1
        %v1256 = vsel %vm1244, %v1251, %v1255
        %1258 = vst [vmem:[#allocation4] sm:$0xff] %v1256
        %v1259 = vld [vmem:[#allocation4] sm:$0xff]
        %v1260 = vld [vmem:[%s11] sm:$0xf]
        %v1261 = vld [vmem:[%s11 + $0x4] sm:$0xf]
        %v1262 = vld [vmem:[%s11 + $0x8] sm:$0xf]
        %v1263 = vld [vmem:[%s11 + $0xc] sm:$0xf]
        %v1264 = vld [vmem:[%s11 + $0x10] sm:$0xf]
        %v1265 = vld [vmem:[%s11 + $0x14] sm:$0xf]
        %v1266 = vld [vmem:[%s11 + $0x18] sm:$0xf]
        %v1267 = vld [vmem:[%s11 + $0x1c] sm:$0xf]
        %v1268 = vld [vmem:[%s11 + $0x20] sm:$0xf]
        %v1269 = vld [vmem:[%s11 + $0x24] sm:$0xf]
        %v1270 = vld [vmem:[%s11 + $0x28] sm:$0xf]
        %v1271 = vld [vmem:[%s11 + $0x2c] sm:$0xf]
        %v1272 = vld [vmem:[%s11 + $0x30] sm:$0xf]
        %v1273 = vld [vmem:[%s11 + $0x34] sm:$0xf]
        %v1274 = vld [vmem:[%s11 + $0x38] sm:$0xf]
        %v1275 = vld [vmem:[%s11 + $0x3c] sm:$0xf]
        %v1276 = vld [vmem:[%s12] sm:$0x1]
        %v1278 = vlaneseq
        %v1279 = vshrl.u32 %v1278, 7
        %v1280 = vsub.s32 0, %v1279
        %v1281 = vrot.slane %v1276, %v1280
        %v1299 = vunpack.c.l.b16 %v1260
        %v1300 = vunpack.c.l.b16 %v1261
        %v1301 = vunpack.c.l.b16 %v1262
        %v1302 = vunpack.c.l.b16 %v1263
        %v1303 = vunpack.c.l.b16 %v1264
        %v1304 = vunpack.c.l.b16 %v1265
        %v1305 = vunpack.c.l.b16 %v1266
        %v1306 = vunpack.c.l.b16 %v1267
        %v1307 = vunpack.c.l.b16 %v1268
        %v1308 = vunpack.c.l.b16 %v1269
        %v1309 = vunpack.c.l.b16 %v1270
        %v1310 = vunpack.c.l.b16 %v1271
        %v1311 = vunpack.c.l.b16 %v1272
        %v1312 = vunpack.c.l.b16 %v1273
        %v1313 = vunpack.c.l.b16 %v1274
        %v1314 = vunpack.c.l.b16 %v1275
        %v1315 = vpack.c.b16 %v1300, %v1299
        %v1316 = vpack.c.b16 %v1302, %v1301
        %v1317 = vpack.c.b16 %v1304, %v1303
        %v1318 = vpack.c.b16 %v1306, %v1305
        %v1319 = vpack.c.b16 %v1308, %v1307
        %v1320 = vpack.c.b16 %v1310, %v1309
        %v1321 = vpack.c.b16 %v1312, %v1311
        %v1322 = vpack.c.b16 %v1314, %v1313
        %1331 = vmatprep.subr.bf16.mxu0 0
        %1332 = vmatpush1.bf16.msra.mxu0 %v1315
        %1333 = vmatprep.subr.bf16.mxu0 0
        %1334 = vmatpush1.bf16.msra.mxu0 %v1316
        %1335 = vmatprep.subr.bf16.mxu0 0
        %1336 = vmatpush1.bf16.msra.mxu0 %v1317
        %1337 = vmatprep.subr.bf16.mxu0 0
        %1338 = vmatpush1.bf16.msra.mxu0 %v1318
        %1339 = vmatprep.subr.bf16.mxu0 0
        %1340 = vmatpush1.bf16.msra.mxu0 %v1319
        %1341 = vmatprep.subr.bf16.mxu0 0
        %1342 = vmatpush1.bf16.msra.mxu0 %v1320
        %1343 = vmatprep.subr.bf16.mxu0 0
        %1344 = vmatpush1.bf16.msra.mxu0 %v1321
        %1345 = vmatprep.subr.bf16.mxu0 0
        %1346 = vmatpush1.bf16.msra.mxu0 %v1322
        %1347 = vmatprep.subr.bf16.mxu0 0
        %1348 = vmatpush1.bf16.msra.mxu0 0
        %1349 = vmatprep.subr.bf16.mxu0 0
        %1350 = vmatpush1.bf16.msra.mxu0 0
        %1351 = vmatprep.subr.bf16.mxu0 0
        %1352 = vmatpush1.bf16.msra.mxu0 0
        %1353 = vmatprep.subr.bf16.mxu0 0
        %1354 = vmatpush1.bf16.msra.mxu0 0
        %1355 = vmatprep.subr.bf16.mxu0 0
        %1356 = vmatpush1.bf16.msra.mxu0 0
        %1357 = vmatprep.subr.bf16.mxu0 0
        %1358 = vmatpush1.bf16.msra.mxu0 0
        %1359 = vmatprep.subr.bf16.mxu0 0
        %1360 = vmatpush1.bf16.msra.mxu0 0
        %1361 = vmatprep.subr.bf16.mxu0 0
        %1362 = vmatpush1.bf16.msra.mxu0 0
        %1363 = vmatprep.mubr.bf16.mxu0 0
        %1364 = vmatmul.mubr.bf16.gmra.mrb[0].mxu0 %v1259
        %v1365 = vpop.f32.mrb[0].mxu0
        %v1366 = vadd.f32 %v1281, %v1365
        %v1367 = vpop.f32.mrb[0].mxu0
        %v1368 = vpop.f32.mrb[0].mxu0
        %v1369 = vadd.f32 %v1281, %v1368
        %v1370 = vpop.f32.mrb[0].mxu0
        %1371 = vdwg.mxu0
        %1372 = vst.msk [vmem:[%s583] sm:$0xff] %vm660, %v1366
        %1373 = vst.msk [vmem:[%s583 + $0x8] sm:$0xff] %vm660, %v1369
        %s1374 = sand.u32 %s363, 1
        %s1375 = scalar_lea.sflag [#allocation7], %s1374
        %s1376 = sand.u32 %s363, 1
        %s1377 = smul.addr %s1376, 16
        %s1378 = scalar_lea.vmem [#allocation11], %s1377
        // Predicated region
        $region93: #{tpu_custom_call.1} parent=71 // pred_check
          %p1379 = pneg %p373
        $region94: #{tpu_custom_call.1} parent=71 // pred_check_branch
          %1381 = sbr.rel (%p1379) target = $region96
        $region95: #{tpu_custom_call.1} parent=71 // pred_region
          %s1382 = smul.u32 2, %s36
          %s1384 = ssub.s32 256, 256
          %1385 = vsyncadd %s1375, %s1384
          %s1386 = smul.addr %s35, 2
          %s1387 = sadd.s32 %s1382, %s1386
          %s1388 = smul.addr %s1387, 128
          %s1389 = scalar_lea.hbm %s13, %s1388
          %s1390 = sshll.u32 %s1378, 4
          %s1391 = int_to_ptr.vmem [resolvable:$true] %s1390
          %1396 = dma.vmem_to_hbm [thread:$0]  %s1391, 256, %s1389, %s1375, 128, 128, 8
        $region96: #{tpu_custom_call.1} parent=71 // pred_fallthru
          _
      $region72: #{tpu_custom_call.1} parent=5 // pred_fallthru
        _
      %p1397 = scmp.le.s32.totalorder 2, %s26
      // Predicated region
      $region97: #{tpu_custom_call.1} parent=5 // pred_check
        %p1398 = pneg %p1397
      $region98: #{tpu_custom_call.1} parent=5 // pred_check_branch
        %1400 = sbr.rel (%p1398) target = $region100
      $region99: #{tpu_custom_call.1} parent=5 // pred_region
        %s1401 = ssub.s32 %s26, 2
        // Predicated region
        $region101: #{tpu_custom_call.1} parent=99 // pred_check
          %p1402 = pneg %p379
        $region102: #{tpu_custom_call.1} parent=99 // pred_check_branch
          %1404 = sbr.rel (%p1402) target = $region104
        $region103: #{tpu_custom_call.1} parent=99 // pred_region
          %s1405 = sand.u32 %s364, 1
          %s1406 = scalar_lea.sflag [#allocation7], %s1405
          %s1407 = sand.u32 %s364, 1
          %s1408 = smul.addr %s1407, 16
          %s1409 = scalar_lea.vmem [#allocation11], %s1408
          %1410 = dma.done %s1406, 256
        $region104: #{tpu_custom_call.1} parent=99 // pred_fallthru
          _
      $region100: #{tpu_custom_call.1} parent=5 // pred_fallthru
        _
    $region6: #{tpu_custom_call.1} parent=1 // loop_footer
      %s30 = sadd.s32 1, %s26
    $region7: #{tpu_custom_call.1} parent=1 // loop_footer_branch
      %25 = sbr.rel target = $region3
    $region8: #{tpu_custom_call.1} parent=1 // loop_exit
      _
    %1411 = vsyncpa [#allocation6], 1
    %s1412 = scalar_lea.sflag [#allocation6], 1
    %1413 = vsyncpa %s1412, 1
    %1414 = vsyncpa [#allocation9], 1
    %1415 = vsyncpa [#allocation7], 1
    %s1416 = scalar_lea.sflag [#allocation7], 1
    %1417 = vsyncpa %s1416, 1

</llo_original>
